<compile_context>
chip_gen: v6e
topology: v6e:2x2x1
jax: 0.10.0
libtpu: 0.0.40
codegen_flags: <defaults>
</compile_context>

<pallas_src>
import functools

import jax
import jax.numpy as jnp
from jax.experimental import pallas as pl
from jax.experimental.pallas import tpu as pltpu

LANE = 128


def _round_up(x, m):
    return ((x + m - 1) // m) * m


def _pad_to(x, shape):
    pads = [(0, s - d) for d, s in zip(x.shape, shape)]
    if any(p for _, p in pads):
        return jnp.pad(x, pads)
    return x


# ----------------------------------------------------------------------------
# Fused kernel over a (batch, time-tile) grid.
#
# On the first time tile of each batch (t == 0):
#   spk  = relu(mean_Te(enr[b]) @ W_spk + b_spk)        [1, Ep]   (output)
#   gate = sigmoid(spk @ W_g)                           [1, Hp]   (VMEM scratch)
# On every (b, t):
#   h    = relu(mix_tile @ W_enc + b_enc)               [tT, Hp]
#   est  = (h * gate) @ W_dec + b_dec                   [tT, Fp]
#
# Padding note: padded H columns of gate are sigmoid(0)=0.5, but h is exactly
# zero there (zero-padded W_enc/b_enc) and the matching W_dec rows are zero,
# so no leakage into est.
# ----------------------------------------------------------------------------
def fused_kernel(enr_ref, mix_ref, w_spk_ref, b_spk_ref, w_g_ref,
                 w_enc_ref, b_enc_ref, w_dec_ref, b_dec_ref,
                 est_ref, spk_ref, gate_sc):
    # --- speaker path: once per batch (time axis is "arbitrary") -----------
    @pl.when(pl.program_id(1) == 0)
    def _():
        mean = jnp.mean(enr_ref[0], axis=0, keepdims=True)            # [1, Fp] f32
        spk = jnp.dot(mean.astype(jnp.bfloat16), w_spk_ref[...],
                      preferred_element_type=jnp.float32)             # [1, Ep]
        spk = jnp.maximum(spk + b_spk_ref[...], 0.0)                  # ReLU
        gate_sc[...] = jax.nn.sigmoid(
            jnp.dot(spk.astype(jnp.bfloat16), w_g_ref[...],
                    preferred_element_type=jnp.float32))              # [1, Hp]
        spk_ref[0] = spk                                              # revisited block

    # --- extractor: every (batch, time-tile) -------------------------------
    x = mix_ref[0]                                                    # [tT, Fp] bf16
    h = jnp.dot(x, w_enc_ref[...], preferred_element_type=jnp.float32)
    h = jnp.maximum(h + b_enc_ref[...], 0.0)                          # [tT, Hp] f32
    h = h * gate_sc[...]                                              # per-batch gate
    est = jnp.dot(h.astype(jnp.bfloat16), w_dec_ref[...],
                  preferred_element_type=jnp.float32)                 # [tT, Fp]
    est_ref[0] = (est + b_dec_ref[...]).astype(est_ref.dtype)


# ----------------------------------------------------------------------------
# Python wrapper (= OnnxModel.forward)
# ----------------------------------------------------------------------------
@functools.partial(jax.jit, static_argnames=("tile_t",))
def onnx_model_forward(mix, enr, params, tile_t=512):
    B, T, F = mix.shape
    _, Te, _ = enr.shape
    E = params["w_spk"].shape[1]
    H = params["w_enc"].shape[1]

    # Lane-dense padding of feature-like axes; tile & (minimally) pad time.
    Fp, Hp, Ep = (_round_up(d, LANE) for d in (F, H, E))
    tT = min(tile_t, _round_up(T, 8))
    Tp = _round_up(T, tT)

    # Pad + cast in one materialized pass; bf16 halves the hot kernel's reads.
    mix_p = _pad_to(mix, (B, Tp, Fp)).astype(jnp.bfloat16)
    enr_p = _pad_to(enr, (B, Te, Fp)).astype(jnp.float32)   # f32 mean-pool

    w_spk = _pad_to(params["w_spk"], (Fp, Ep)).astype(jnp.bfloat16)
    b_spk = _pad_to(params["b_spk"], (1, Ep)).astype(jnp.float32)
    w_g   = _pad_to(params["w_g"],   (Ep, Hp)).astype(jnp.bfloat16)
    w_enc = _pad_to(params["w_enc"], (Fp, Hp)).astype(jnp.bfloat16)
    b_enc = _pad_to(params["b_enc"], (1, Hp)).astype(jnp.float32)
    w_dec = _pad_to(params["w_dec"], (Hp, Fp)).astype(jnp.bfloat16)
    b_dec = _pad_to(params["b_dec"], (1, Fp)).astype(jnp.float32)

    est_p, spk_p = pl.pallas_call(
        fused_kernel,
        out_shape=(jax.ShapeDtypeStruct((B, Tp, Fp), jnp.bfloat16),
                   jax.ShapeDtypeStruct((B, 1, Ep), jnp.float32)),
        grid_spec=pltpu.PrefetchScalarGridSpec(
            num_scalar_prefetch=0,
            grid=(B, Tp // tT),
            in_specs=[
                pl.BlockSpec((1, Te, Fp), lambda b, t: (b, 0, 0)),   # enr (per batch)
                pl.BlockSpec((1, tT, Fp), lambda b, t: (b, t, 0)),   # mix tile
                pl.BlockSpec((Fp, Ep),    lambda b, t: (0, 0)),      # W_spk
                pl.BlockSpec((1, Ep),     lambda b, t: (0, 0)),      # b_spk
                pl.BlockSpec((Ep, Hp),    lambda b, t: (0, 0)),      # W_g
                pl.BlockSpec((Fp, Hp),    lambda b, t: (0, 0)),      # W_enc
                pl.BlockSpec((1, Hp),     lambda b, t: (0, 0)),      # b_enc
                pl.BlockSpec((Hp, Fp),    lambda b, t: (0, 0)),      # W_dec
                pl.BlockSpec((1, Fp),     lambda b, t: (0, 0)),      # b_dec
            ],
            out_specs=(
                pl.BlockSpec((1, tT, Fp), lambda b, t: (b, t, 0)),   # est
                pl.BlockSpec((1, 1, Ep),  lambda b, t: (b, 0, 0)),   # spk (resident over t)
            ),
            scratch_shapes=[pltpu.VMEM((1, Hp), jnp.float32)],       # gate
        ),
        compiler_params=pltpu.CompilerParams(
            # batch axis parallel (v7x megacore sharding); time axis must be
            # sequential because the gate scratch / spk block persist over t.
            dimension_semantics=("parallel", "arbitrary"),
            vmem_limit_bytes=32 * 1024 * 1024,
        ),
    )(enr_p, mix_p, w_spk, b_spk, w_g, w_enc, b_enc, w_dec, b_dec)

    est = est_p[:, :T, :F]          # bf16 estimate (matmuls already bf16)
    est_spk = spk_p[:, 0, :E]       # f32 speaker embedding
    return est, est_spk


# ----------------------------------------------------------------------------
# Pure-JAX reference (f32) of the synthesized inner model
# ----------------------------------------------------------------------------
def reference_forward(mix, enr, params):
    mean = jnp.mean(enr, axis=1)                                 # [B, F]
    spk = jnp.maximum(mean @ params["w_spk"] + params["b_spk"], 0.0)
    h = jnp.maximum(jnp.einsum("btf,fh->bth", mix, params["w_enc"])
                    + params["b_enc"], 0.0)
    gate = jax.nn.sigmoid(spk @ params["w_g"])                   # [B, H]
    est = jnp.einsum("bth,hf->btf", h * gate[:, None, :], params["w_dec"])
    est = est + params["b_dec"]
    return est, spk


def init_params(key, F, H, E):
    ks = jax.random.split(key, 5)
    scale = 0.1
    return {
        "w_spk": scale * jax.random.normal(ks[0], (F, E), jnp.float32),
        "b_spk": jnp.zeros((1, E), jnp.float32),
        "w_enc": scale * jax.random.normal(ks[1], (F, H), jnp.float32),
        "b_enc": jnp.zeros((1, H), jnp.float32),
        "w_g":   scale * jax.random.normal(ks[2], (E, H), jnp.float32),
        "w_dec": scale * jax.random.normal(ks[3], (H, F), jnp.float32),
        "b_dec": jnp.zeros((1, F), jnp.float32),
    }


if __name__ == "__main__":
    # small shapes: batch=2, mix frames=512, enrollment frames=64,
    # feature dim=128, hidden=128, speaker-embedding dim=128
    B, T, Te, F, H, E = 2, 512, 64, 128, 128, 128

    key = jax.random.PRNGKey(0)
    k_mix, k_enr, k_par = jax.random.split(key, 3)
    mix = jax.random.normal(k_mix, (B, T, F), jnp.float32)
    enr = jax.random.normal(k_enr, (B, Te, F), jnp.float32)
    params = init_params(k_par, F, H, E)

    est, est_spk = onnx_model_forward(mix, enr, params, tile_t=512)
    jax.block_until_ready((est, est_spk))

    assert est.shape == (B, T, F)
    assert est_spk.shape == (B, E)

    # numerical sanity vs f32 reference (loose tolerance: bf16 matmuls + bf16 est)
    est_ref, spk_ref = reference_forward(mix, enr, params)
    assert jnp.allclose(est.astype(jnp.float32), est_ref, atol=1e-1, rtol=1e-1), \
        float(jnp.max(jnp.abs(est.astype(jnp.float32) - est_ref)))
    assert jnp.allclose(est_spk, spk_ref, atol=7e-2, rtol=7e-2), \
        float(jnp.max(jnp.abs(est_spk - spk_ref)))

    print("KERNEL_OK")
</pallas_src>

<mosaic_0001>
module attributes {stable_mosaic.version = 11 : i64} {
  func.func @fused_kernel(%arg0: i32, %arg1: i32, %arg2: memref<1x64x128xf32, #tpu.memory_space<vmem>>, %arg3: memref<1x512x128xbf16, #tpu.memory_space<vmem>>, %arg4: memref<128x128xbf16, #tpu.memory_space<vmem>>, %arg5: memref<1x128xf32, #tpu.memory_space<vmem>>, %arg6: memref<128x128xbf16, #tpu.memory_space<vmem>>, %arg7: memref<128x128xbf16, #tpu.memory_space<vmem>>, %arg8: memref<1x128xf32, #tpu.memory_space<vmem>>, %arg9: memref<128x128xbf16, #tpu.memory_space<vmem>>, %arg10: memref<1x128xf32, #tpu.memory_space<vmem>>, %arg11: memref<1x512x128xbf16, #tpu.memory_space<vmem>>, %arg12: memref<1x1x128xf32, #tpu.memory_space<vmem>>, %arg13: memref<1x128xf32, #tpu.memory_space<vmem>>) attributes {dimension_semantics = [#tpu.dimension_semantics<parallel>, #tpu.dimension_semantics<arbitrary>], iteration_bounds = array<i64: 2, 1>, scalar_prefetch = 0 : i64, scratch_operands = 1 : i64, tpu.core_type = #tpu.core_type<tc>, window_params = [{transform_indices = @transform_0, window_bounds = array<i64: 1, 64, 128>}, {transform_indices = @transform_1, window_bounds = array<i64: 1, 512, 128>}, {pipeline_mode = #tpu.pipeline_mode<synchronous>, transform_indices = @transform_2, window_bounds = array<i64: 128, 128>}, {pipeline_mode = #tpu.pipeline_mode<synchronous>, transform_indices = @transform_3, window_bounds = array<i64: 1, 128>}, {pipeline_mode = #tpu.pipeline_mode<synchronous>, transform_indices = @transform_4, window_bounds = array<i64: 128, 128>}, {pipeline_mode = #tpu.pipeline_mode<synchronous>, transform_indices = @transform_5, window_bounds = array<i64: 128, 128>}, {pipeline_mode = #tpu.pipeline_mode<synchronous>, transform_indices = @transform_6, window_bounds = array<i64: 1, 128>}, {pipeline_mode = #tpu.pipeline_mode<synchronous>, transform_indices = @transform_7, window_bounds = array<i64: 128, 128>}, {pipeline_mode = #tpu.pipeline_mode<synchronous>, transform_indices = @transform_8, window_bounds = array<i64: 1, 128>}, {transform_indices = @transform_9, window_bounds = array<i64: 1, 512, 128>}, {transform_indices = @transform_10, window_bounds = array<i64: 1, 1, 128>}]} {
    %c0_i32 = arith.constant 0 : i32
    %0 = arith.cmpi eq, %arg1, %c0_i32 : i32
    %1 = arith.extui %0 : i1 to i32
    %c0_i32_0 = arith.constant 0 : i32
    %2 = arith.cmpi ne, %1, %c0_i32_0 : i32
    scf.if %2 {
      %c0_18 = arith.constant 0 : index
      %c0_19 = arith.constant 0 : index
      %c0_20 = arith.constant 0 : index
      %25 = vector.load %arg2[%c0_18, %c0_19, %c0_20] : memref<1x64x128xf32, #tpu.memory_space<vmem>>, vector<1x64x128xf32>
      %26 = vector.shape_cast %25 : vector<1x64x128xf32> to vector<64x128xf32>
      %cst_21 = arith.constant dense<0.000000e+00> : vector<128xf32>
      %27 = vector.multi_reduction <add>, %26, %cst_21 [0] : vector<64x128xf32> to vector<128xf32>
      %28 = vector.shape_cast %27 : vector<128xf32> to vector<1x128xf32>
      %cst_22 = arith.constant 6.400000e+01 : f32
      %29 = vector.broadcast %cst_22 : f32 to vector<1x128xf32>
      %30 = arith.divf %28, %29 : vector<1x128xf32>
      %31 = arith.truncf %30 : vector<1x128xf32> to vector<1x128xbf16>
      %c0_23 = arith.constant 0 : index
      %c0_24 = arith.constant 0 : index
      %32 = vector.load %arg4[%c0_23, %c0_24] : memref<128x128xbf16, #tpu.memory_space<vmem>>, vector<128x128xbf16>
      %cst_25 = arith.constant dense<0.000000e+00> : vector<1x128xf32>
      %33 = tpu.matmul %31, %32, %cst_25 {dimension_numbers = #tpu.dot_dimension_numbers<[1], [0], [0], [1], [0, 0, 1, 1], [], []>} : vector<1x128xbf16>, vector<128x128xbf16>, vector<1x128xf32> -> vector<1x128xf32>
      %c0_26 = arith.constant 0 : index
      %c0_27 = arith.constant 0 : index
      %34 = vector.load %arg5[%c0_26, %c0_27] : memref<1x128xf32, #tpu.memory_space<vmem>>, vector<1x128xf32>
      %35 = arith.addf %33, %34 : vector<1x128xf32>
      %cst_28 = arith.constant 0.000000e+00 : f32
      %36 = vector.broadcast %cst_28 : f32 to vector<1x128xf32>
      %37 = arith.maximumf %35, %36 : vector<1x128xf32>
      %38 = arith.truncf %37 : vector<1x128xf32> to vector<1x128xbf16>
      %c0_29 = arith.constant 0 : index
      %c0_30 = arith.constant 0 : index
      %39 = vector.load %arg6[%c0_29, %c0_30] : memref<128x128xbf16, #tpu.memory_space<vmem>>, vector<128x128xbf16>
      %cst_31 = arith.constant dense<0.000000e+00> : vector<1x128xf32>
      %40 = tpu.matmul %38, %39, %cst_31 {dimension_numbers = #tpu.dot_dimension_numbers<[1], [0], [0], [1], [0, 0, 1, 1], [], []>} : vector<1x128xbf16>, vector<128x128xbf16>, vector<1x128xf32> -> vector<1x128xf32>
      %41 = arith.negf %40 : vector<1x128xf32>
      %42 = math.exp %41 : vector<1x128xf32>
      %cst_32 = arith.constant 1.000000e+00 : f32
      %43 = vector.broadcast %cst_32 : f32 to vector<1x128xf32>
      %44 = arith.addf %43, %42 : vector<1x128xf32>
      %45 = arith.divf %43, %44 : vector<1x128xf32>
      %c0_33 = arith.constant 0 : index
      %c0_34 = arith.constant 0 : index
      %46 = vector.load %arg13[%c0_33, %c0_34] : memref<1x128xf32, #tpu.memory_space<vmem>>, vector<1x128xf32>
      tpu.vector_store %arg13[%c0_33, %c0_34], %45 {strides = array<i32>} : memref<1x128xf32, #tpu.memory_space<vmem>>, vector<1x128xf32>,
      %c0_35 = arith.constant 0 : index
      %c0_36 = arith.constant 0 : index
      %c0_37 = arith.constant 0 : index
      %47 = vector.load %arg12[%c0_35, %c0_36, %c0_37] : memref<1x1x128xf32, #tpu.memory_space<vmem>>, vector<1x1x128xf32>
      %48 = vector.shape_cast %47 : vector<1x1x128xf32> to vector<1x128xf32>
      %49 = vector.shape_cast %37 : vector<1x128xf32> to vector<1x1x128xf32>
      tpu.vector_store %arg12[%c0_35, %c0_36, %c0_37], %49 {strides = array<i32>} : memref<1x1x128xf32, #tpu.memory_space<vmem>>, vector<1x1x128xf32>,
    } else {
    }
    %c0 = arith.constant 0 : index
    %c0_1 = arith.constant 0 : index
    %c0_2 = arith.constant 0 : index
    %3 = vector.load %arg3[%c0, %c0_1, %c0_2] : memref<1x512x128xbf16, #tpu.memory_space<vmem>>, vector<1x512x128xbf16>
    %4 = vector.shape_cast %3 : vector<1x512x128xbf16> to vector<512x128xbf16>
    %c0_3 = arith.constant 0 : index
    %c0_4 = arith.constant 0 : index
    %5 = vector.load %arg7[%c0_3, %c0_4] : memref<128x128xbf16, #tpu.memory_space<vmem>>, vector<128x128xbf16>
    %cst = arith.constant dense<0.000000e+00> : vector<512x128xf32>
    %6 = tpu.matmul %4, %5, %cst {dimension_numbers = #tpu.dot_dimension_numbers<[1], [0], [0], [1], [0, 0, 1, 1], [], []>} : vector<512x128xbf16>, vector<128x128xbf16>, vector<512x128xf32> -> vector<512x128xf32>
    %c0_5 = arith.constant 0 : index
    %c0_6 = arith.constant 0 : index
    %7 = vector.load %arg8[%c0_5, %c0_6] : memref<1x128xf32, #tpu.memory_space<vmem>>, vector<1x128xf32>
    %8 = vector.broadcast %7 : vector<1x128xf32> to vector<512x128xf32>
    %9 = arith.addf %6, %8 : vector<512x128xf32>
    %cst_7 = arith.constant 0.000000e+00 : f32
    %10 = vector.broadcast %cst_7 : f32 to vector<512x128xf32>
    %11 = arith.maximumf %9, %10 : vector<512x128xf32>
    %c0_8 = arith.constant 0 : index
    %c0_9 = arith.constant 0 : index
    %12 = vector.load %arg13[%c0_8, %c0_9] : memref<1x128xf32, #tpu.memory_space<vmem>>, vector<1x128xf32>
    %13 = vector.broadcast %12 : vector<1x128xf32> to vector<512x128xf32>
    %14 = arith.mulf %11, %13 : vector<512x128xf32>
    %15 = arith.truncf %14 : vector<512x128xf32> to vector<512x128xbf16>
    %c0_10 = arith.constant 0 : index
    %c0_11 = arith.constant 0 : index
    %16 = vector.load %arg9[%c0_10, %c0_11] : memref<128x128xbf16, #tpu.memory_space<vmem>>, vector<128x128xbf16>
    %cst_12 = arith.constant dense<0.000000e+00> : vector<512x128xf32>
    %17 = tpu.matmul %15, %16, %cst_12 {dimension_numbers = #tpu.dot_dimension_numbers<[1], [0], [0], [1], [0, 0, 1, 1], [], []>} : vector<512x128xbf16>, vector<128x128xbf16>, vector<512x128xf32> -> vector<512x128xf32>
    %c0_13 = arith.constant 0 : index
    %c0_14 = arith.constant 0 : index
    %18 = vector.load %arg10[%c0_13, %c0_14] : memref<1x128xf32, #tpu.memory_space<vmem>>, vector<1x128xf32>
    %19 = vector.broadcast %18 : vector<1x128xf32> to vector<512x128xf32>
    %20 = arith.addf %17, %19 : vector<512x128xf32>
    %21 = arith.truncf %20 : vector<512x128xf32> to vector<512x128xbf16>
    %c0_15 = arith.constant 0 : index
    %c0_16 = arith.constant 0 : index
    %c0_17 = arith.constant 0 : index
    %22 = vector.load %arg11[%c0_15, %c0_16, %c0_17] : memref<1x512x128xbf16, #tpu.memory_space<vmem>>, vector<1x512x128xbf16>
    %23 = vector.shape_cast %22 : vector<1x512x128xbf16> to vector<512x128xbf16>
    %24 = vector.shape_cast %21 : vector<512x128xbf16> to vector<1x512x128xbf16>
    tpu.vector_store %arg11[%c0_15, %c0_16, %c0_17], %24 {strides = array<i32>} : memref<1x512x128xbf16, #tpu.memory_space<vmem>>, vector<1x512x128xbf16>,
    return
  }
  func.func @transform_0(%arg0: i32, %arg1: i32) -> (i32, i32, i32) {
    %c0_i32 = arith.constant 0 : i32
    %c0_i32_0 = arith.constant 0 : i32
    %c0_i32_1 = arith.constant 0 : i32
    return %arg0, %c0_i32, %c0_i32_0 : i32, i32, i32
  }
  func.func @transform_1(%arg0: i32, %arg1: i32) -> (i32, i32, i32) {
    %c0_i32 = arith.constant 0 : i32
    %c0_i32_0 = arith.constant 0 : i32
    return %arg0, %arg1, %c0_i32 : i32, i32, i32
  }
  func.func @transform_2(%arg0: i32, %arg1: i32) -> (i32, i32) {
    %c0_i32 = arith.constant 0 : i32
    %c0_i32_0 = arith.constant 0 : i32
    %c0_i32_1 = arith.constant 0 : i32
    return %c0_i32, %c0_i32_0 : i32, i32
  }
  func.func @transform_3(%arg0: i32, %arg1: i32) -> (i32, i32) {
    %c0_i32 = arith.constant 0 : i32
    %c0_i32_0 = arith.constant 0 : i32
    %c0_i32_1 = arith.constant 0 : i32
    return %c0_i32, %c0_i32_0 : i32, i32
  }
  func.func @transform_4(%arg0: i32, %arg1: i32) -> (i32, i32) {
    %c0_i32 = arith.constant 0 : i32
    %c0_i32_0 = arith.constant 0 : i32
    %c0_i32_1 = arith.constant 0 : i32
    return %c0_i32, %c0_i32_0 : i32, i32
  }
  func.func @transform_5(%arg0: i32, %arg1: i32) -> (i32, i32) {
    %c0_i32 = arith.constant 0 : i32
    %c0_i32_0 = arith.constant 0 : i32
    %c0_i32_1 = arith.constant 0 : i32
    return %c0_i32, %c0_i32_0 : i32, i32
  }
  func.func @transform_6(%arg0: i32, %arg1: i32) -> (i32, i32) {
    %c0_i32 = arith.constant 0 : i32
    %c0_i32_0 = arith.constant 0 : i32
    %c0_i32_1 = arith.constant 0 : i32
    return %c0_i32, %c0_i32_0 : i32, i32
  }
  func.func @transform_7(%arg0: i32, %arg1: i32) -> (i32, i32) {
    %c0_i32 = arith.constant 0 : i32
    %c0_i32_0 = arith.constant 0 : i32
    %c0_i32_1 = arith.constant 0 : i32
    return %c0_i32, %c0_i32_0 : i32, i32
  }
  func.func @transform_8(%arg0: i32, %arg1: i32) -> (i32, i32) {
    %c0_i32 = arith.constant 0 : i32
    %c0_i32_0 = arith.constant 0 : i32
    %c0_i32_1 = arith.constant 0 : i32
    return %c0_i32, %c0_i32_0 : i32, i32
  }
  func.func @transform_9(%arg0: i32, %arg1: i32) -> (i32, i32, i32) {
    %c0_i32 = arith.constant 0 : i32
    %c0_i32_0 = arith.constant 0 : i32
    return %arg0, %arg1, %c0_i32 : i32, i32, i32
  }
  func.func @transform_10(%arg0: i32, %arg1: i32) -> (i32, i32, i32) {
    %c0_i32 = arith.constant 0 : i32
    %c0_i32_0 = arith.constant 0 : i32
    %c0_i32_1 = arith.constant 0 : i32
    return %arg0, %c0_i32, %c0_i32_0 : i32, i32, i32
  }
}

</mosaic_0001>

<llo_original>
// kernel: onnx_model_forward.1
$region0: #{onnx_model_forward.1}
  #allocation0 [shape = 'u32[]', space=smem, size = 0x4, offset = 0x4, fixed_abs, tag = 'smem constant byte address 0x4 - core index']
  #allocation1 [shape = 'u32[144,128]{1,0:T(1,128)}', space=vmem, size = 0x12000, scoped, tag = 'internal scratch']
  #allocation2 [shape = 'f32[1,128]{1,0:T(1,128)}', space=vmem, size = 0x200, scoped, tag = 'scratch operand']
  %s0 = inlined_call_operand.vmem [shape: f32[2,64,128], index: 0, kind: input, shape index: {}]
  %s1 = inlined_call_operand.vmem [shape: bf16[2,512,128], index: 1, kind: input, shape index: {}]
  %s2 = inlined_call_operand.vmem [shape: bf16[128,128], index: 2, kind: input, shape index: {}]
  %s3 = inlined_call_operand.vmem [shape: f32[1,128], index: 3, kind: input, shape index: {}]
  %s4 = inlined_call_operand.vmem [shape: bf16[128,128], index: 4, kind: input, shape index: {}]
  %s5 = inlined_call_operand.vmem [shape: bf16[128,128], index: 5, kind: input, shape index: {}]
  %s6 = inlined_call_operand.vmem [shape: f32[1,128], index: 6, kind: input, shape index: {}]
  %s7 = inlined_call_operand.vmem [shape: bf16[128,128], index: 7, kind: input, shape index: {}]
  %s8 = inlined_call_operand.vmem [shape: f32[1,128], index: 8, kind: input, shape index: {}]
  %s9 = inlined_call_operand.hbm [shape: bf16[2,512,128], index: 9, kind: output, shape index: {0}]
  %s10 = inlined_call_operand.hbm [shape: f32[2,1,128], index: 10, kind: output, shape index: {1}]
  %11 = xla_tuple %s9, %s10
  %s12 = sld [smem:[#allocation0]]
  $region81: #{onnx_model_forward.1} parent=0
    _
  %s14 = ssub.s32 1, %s12
  %s15 = scalar_select 0, %s14, %s12
  $region1: #{onnx_model_forward.1} parent=0
    #allocation3 [shape = 'u8[262144]{0}', space=vmem, size = 0x40000, scoped, tag = 'output window, operand 0']
    #allocation4 [shape = 's32[2]{0}', space=sflag, size = 0x8, scoped, tag = 'scoped memory for onnx_model_forward.1']
    #allocation5 [shape = 'u8[1024]{0}', space=vmem, size = 0x400, scoped, tag = 'output window, operand 1']
    #allocation6 [shape = 's32[2]{0}', space=sflag, size = 0x8, scoped, tag = 'scoped memory for onnx_model_forward.1']
    %16 = vsyncpa [#allocation4], 0
    %s17 = scalar_lea.sflag [#allocation4], 1
    %18 = vsyncpa %s17, 0
    %19 = vsyncpa [#allocation6], 0
    %s20 = scalar_lea.sflag [#allocation6], 1
    %21 = vsyncpa %s20, 0
    loop: start=0, step=1, limit=4
    $region2: #{onnx_model_forward.1} parent=1 // loop_pre_header
      _
    $region3: #{onnx_model_forward.1} parent=1 // loop_header
      %s23 = sphi 0, %s27
      %p24 = scmp.ge.s32.totalorder %s23, 4
      %s30 = sphi 0, %s42
      %s31 = sphi 0, %s38
      %s32 = sphi 0, %s30
      %s33 = sphi 0, %s31
      %s34 = sphi 0, %s32
      %s35 = sphi 0, %s33
      %s45 = sphi 0, %s47
      %s48 = sphi 0, %s45
      %s49 = sphi 0, %s48
      %s65 = sphi 0, %s49
      %s73 = sphi 0, %s75
      %s76 = sphi 0, %s73
      %s77 = sphi 0, %s76
      %s93 = sphi 0, %s77
      %s97 = sphi 0, %s97
      %s99 = sphi 0, %s97
      %s100 = sphi 0, %s99
      %s114 = sphi 0, %s100
      %s118 = sphi 0, %s118
      %s120 = sphi 0, %s118
      %s121 = sphi 0, %s120
      %s135 = sphi 0, %s121
      %s139 = sphi 0, %s139
      %s141 = sphi 0, %s139
      %s142 = sphi 0, %s141
      %s156 = sphi 0, %s142
      %s160 = sphi 0, %s160
      %s162 = sphi 0, %s160
      %s163 = sphi 0, %s162
      %s177 = sphi 0, %s163
      %s181 = sphi 0, %s181
      %s183 = sphi 0, %s181
      %s184 = sphi 0, %s183
      %s198 = sphi 0, %s184
      %s202 = sphi 0, %s202
      %s204 = sphi 0, %s202
      %s205 = sphi 0, %s204
      %s219 = sphi 0, %s205
      %s223 = sphi 0, %s223
      %s225 = sphi 0, %s223
      %s226 = sphi 0, %s225
      %s240 = sphi 0, %s226
      %s248 = sphi 0, %s250
      %s251 = sphi 0, %s248
      %s252 = sphi 0, %s251
      %s268 = sphi 0, %s252
      %s274 = sphi 0, %s276
      %s277 = sphi 0, %s274
      %s278 = sphi 0, %s277
      %s294 = sphi 0, %s278
    $region4: #{onnx_model_forward.1} parent=1 // loop_header_branch
      %26 = sbr.rel (%p24) target = $region8
    $region5: #{onnx_model_forward.1} parent=1 // loop_body
      %s28 = ssub.s32 %s23, 1
      %s29 = ssub.s32 %s23, 2
      %s36 = sadd.s32 1, %s31
      %p37 = scmp.ge.s32.totalorder %s36, 1
      %s38 = scalar_select %p37, 0, %s36
      %s39 = sadd.s32 1, %s30
      %s40 = scalar_select %p37, %s39, %s30
      %p41 = scmp.ge.s32.totalorder %s40, 2
      %s42 = scalar_select %p41, 0, %s40
      %s43 = ssub.s32 %s30, %s42
      %p44 = scmp.eq.s32.totalorder %s43, 0
      %s46 = sadd.s32 %s45, 1
      %s47 = scalar_select %p44, %s45, %s46
      %p50 = pneg %p44
      %p51 = scmp.eq.s32.totalorder %s23, 1
      %p52 = por %p50, %p51
      %p53 = scmp.ne.s32.totalorder %s45, %s48
      %p54 = scmp.eq.s32.totalorder %s23, 0
      %p55 = por %p53, %p54
      %p56 = scmp.ne.s32.totalorder %s45, %s48
      %p57 = scmp.eq.s32.totalorder %s28, 1
      %p58 = por %p56, %p57
      %p59 = scmp.ne.s32.totalorder %s48, %s49
      %p60 = scmp.eq.s32.totalorder %s28, 0
      %p61 = por %p59, %p60
      %p62 = scmp.ne.s32.totalorder %s48, %s49
      %p63 = scmp.eq.s32.totalorder %s29, 1
      %p64 = por %p62, %p63
      %p66 = scmp.ne.s32.totalorder %s49, %s65
      %p67 = scmp.eq.s32.totalorder %s29, 0
      %p68 = por %p66, %p67
      %s69 = ssub.s32 %s30, %s42
      %s70 = ssub.s32 %s31, %s38
      %s71 = sor.u32 %s69, %s70
      %p72 = scmp.eq.s32.totalorder %s71, 0
      %s74 = sadd.s32 %s73, 1
      %s75 = scalar_select %p72, %s73, %s74
      %p78 = pneg %p72
      %p79 = scmp.eq.s32.totalorder %s23, 1
      %p80 = por %p78, %p79
      %p81 = scmp.ne.s32.totalorder %s73, %s76
      %p82 = scmp.eq.s32.totalorder %s23, 0
      %p83 = por %p81, %p82
      %p84 = scmp.ne.s32.totalorder %s73, %s76
      %p85 = scmp.eq.s32.totalorder %s28, 1
      %p86 = por %p84, %p85
      %p87 = scmp.ne.s32.totalorder %s76, %s77
      %p88 = scmp.eq.s32.totalorder %s28, 0
      %p89 = por %p87, %p88
      %p90 = scmp.ne.s32.totalorder %s76, %s77
      %p91 = scmp.eq.s32.totalorder %s29, 1
      %p92 = por %p90, %p91
      %p94 = scmp.ne.s32.totalorder %s77, %s93
      %p95 = scmp.eq.s32.totalorder %s29, 0
      %p96 = por %p94, %p95
      %s98 = sadd.s32 %s97, 1
      %p101 = scmp.eq.s32.totalorder %s23, 1
      %p102 = scmp.ne.s32.totalorder %s97, %s99
      %p103 = scmp.eq.s32.totalorder %s23, 0
      %p104 = por %p102, %p103
      %p105 = scmp.ne.s32.totalorder %s97, %s99
      %p106 = scmp.eq.s32.totalorder %s28, 1
      %p107 = por %p105, %p106
      %p108 = scmp.ne.s32.totalorder %s99, %s100
      %p109 = scmp.eq.s32.totalorder %s28, 0
      %p110 = por %p108, %p109
      %p111 = scmp.ne.s32.totalorder %s99, %s100
      %p112 = scmp.eq.s32.totalorder %s29, 1
      %p113 = por %p111, %p112
      %p115 = scmp.ne.s32.totalorder %s100, %s114
      %p116 = scmp.eq.s32.totalorder %s29, 0
      %p117 = por %p115, %p116
      %s119 = sadd.s32 %s118, 1
      %p122 = scmp.eq.s32.totalorder %s23, 1
      %p123 = scmp.ne.s32.totalorder %s118, %s120
      %p124 = scmp.eq.s32.totalorder %s23, 0
      %p125 = por %p123, %p124
      %p126 = scmp.ne.s32.totalorder %s118, %s120
      %p127 = scmp.eq.s32.totalorder %s28, 1
      %p128 = por %p126, %p127
      %p129 = scmp.ne.s32.totalorder %s120, %s121
      %p130 = scmp.eq.s32.totalorder %s28, 0
      %p131 = por %p129, %p130
      %p132 = scmp.ne.s32.totalorder %s120, %s121
      %p133 = scmp.eq.s32.totalorder %s29, 1
      %p134 = por %p132, %p133
      %p136 = scmp.ne.s32.totalorder %s121, %s135
      %p137 = scmp.eq.s32.totalorder %s29, 0
      %p138 = por %p136, %p137
      %s140 = sadd.s32 %s139, 1
      %p143 = scmp.eq.s32.totalorder %s23, 1
      %p144 = scmp.ne.s32.totalorder %s139, %s141
      %p145 = scmp.eq.s32.totalorder %s23, 0
      %p146 = por %p144, %p145
      %p147 = scmp.ne.s32.totalorder %s139, %s141
      %p148 = scmp.eq.s32.totalorder %s28, 1
      %p149 = por %p147, %p148
      %p150 = scmp.ne.s32.totalorder %s141, %s142
      %p151 = scmp.eq.s32.totalorder %s28, 0
      %p152 = por %p150, %p151
      %p153 = scmp.ne.s32.totalorder %s141, %s142
      %p154 = scmp.eq.s32.totalorder %s29, 1
      %p155 = por %p153, %p154
      %p157 = scmp.ne.s32.totalorder %s142, %s156
      %p158 = scmp.eq.s32.totalorder %s29, 0
      %p159 = por %p157, %p158
      %s161 = sadd.s32 %s160, 1
      %p164 = scmp.eq.s32.totalorder %s23, 1
      %p165 = scmp.ne.s32.totalorder %s160, %s162
      %p166 = scmp.eq.s32.totalorder %s23, 0
      %p167 = por %p165, %p166
      %p168 = scmp.ne.s32.totalorder %s160, %s162
      %p169 = scmp.eq.s32.totalorder %s28, 1
      %p170 = por %p168, %p169
      %p171 = scmp.ne.s32.totalorder %s162, %s163
      %p172 = scmp.eq.s32.totalorder %s28, 0
      %p173 = por %p171, %p172
      %p174 = scmp.ne.s32.totalorder %s162, %s163
      %p175 = scmp.eq.s32.totalorder %s29, 1
      %p176 = por %p174, %p175
      %p178 = scmp.ne.s32.totalorder %s163, %s177
      %p179 = scmp.eq.s32.totalorder %s29, 0
      %p180 = por %p178, %p179
      %s182 = sadd.s32 %s181, 1
      %p185 = scmp.eq.s32.totalorder %s23, 1
      %p186 = scmp.ne.s32.totalorder %s181, %s183
      %p187 = scmp.eq.s32.totalorder %s23, 0
      %p188 = por %p186, %p187
      %p189 = scmp.ne.s32.totalorder %s181, %s183
      %p190 = scmp.eq.s32.totalorder %s28, 1
      %p191 = por %p189, %p190
      %p192 = scmp.ne.s32.totalorder %s183, %s184
      %p193 = scmp.eq.s32.totalorder %s28, 0
      %p194 = por %p192, %p193
      %p195 = scmp.ne.s32.totalorder %s183, %s184
      %p196 = scmp.eq.s32.totalorder %s29, 1
      %p197 = por %p195, %p196
      %p199 = scmp.ne.s32.totalorder %s184, %s198
      %p200 = scmp.eq.s32.totalorder %s29, 0
      %p201 = por %p199, %p200
      %s203 = sadd.s32 %s202, 1
      %p206 = scmp.eq.s32.totalorder %s23, 1
      %p207 = scmp.ne.s32.totalorder %s202, %s204
      %p208 = scmp.eq.s32.totalorder %s23, 0
      %p209 = por %p207, %p208
      %p210 = scmp.ne.s32.totalorder %s202, %s204
      %p211 = scmp.eq.s32.totalorder %s28, 1
      %p212 = por %p210, %p211
      %p213 = scmp.ne.s32.totalorder %s204, %s205
      %p214 = scmp.eq.s32.totalorder %s28, 0
      %p215 = por %p213, %p214
      %p216 = scmp.ne.s32.totalorder %s204, %s205
      %p217 = scmp.eq.s32.totalorder %s29, 1
      %p218 = por %p216, %p217
      %p220 = scmp.ne.s32.totalorder %s205, %s219
      %p221 = scmp.eq.s32.totalorder %s29, 0
      %p222 = por %p220, %p221
      %s224 = sadd.s32 %s223, 1
      %p227 = scmp.eq.s32.totalorder %s23, 1
      %p228 = scmp.ne.s32.totalorder %s223, %s225
      %p229 = scmp.eq.s32.totalorder %s23, 0
      %p230 = por %p228, %p229
      %p231 = scmp.ne.s32.totalorder %s223, %s225
      %p232 = scmp.eq.s32.totalorder %s28, 1
      %p233 = por %p231, %p232
      %p234 = scmp.ne.s32.totalorder %s225, %s226
      %p235 = scmp.eq.s32.totalorder %s28, 0
      %p236 = por %p234, %p235
      %p237 = scmp.ne.s32.totalorder %s225, %s226
      %p238 = scmp.eq.s32.totalorder %s29, 1
      %p239 = por %p237, %p238
      %p241 = scmp.ne.s32.totalorder %s226, %s240
      %p242 = scmp.eq.s32.totalorder %s29, 0
      %p243 = por %p241, %p242
      %s244 = ssub.s32 %s30, %s42
      %s245 = ssub.s32 %s31, %s38
      %s246 = sor.u32 %s244, %s245
      %p247 = scmp.eq.s32.totalorder %s246, 0
      %s249 = sadd.s32 %s248, 1
      %s250 = scalar_select %p247, %s248, %s249
      %p253 = pneg %p247
      %p254 = scmp.eq.s32.totalorder %s23, 1
      %p255 = por %p253, %p254
      %p256 = scmp.ne.s32.totalorder %s248, %s251
      %p257 = scmp.eq.s32.totalorder %s23, 0
      %p258 = por %p256, %p257
      %p259 = scmp.ne.s32.totalorder %s248, %s251
      %p260 = scmp.eq.s32.totalorder %s28, 1
      %p261 = por %p259, %p260
      %p262 = scmp.ne.s32.totalorder %s251, %s252
      %p263 = scmp.eq.s32.totalorder %s28, 0
      %p264 = por %p262, %p263
      %p265 = scmp.ne.s32.totalorder %s251, %s252
      %p266 = scmp.eq.s32.totalorder %s29, 1
      %p267 = por %p265, %p266
      %p269 = scmp.ne.s32.totalorder %s252, %s268
      %p270 = scmp.eq.s32.totalorder %s29, 0
      %p271 = por %p269, %p270
      %s272 = ssub.s32 %s30, %s42
      %p273 = scmp.eq.s32.totalorder %s272, 0
      %s275 = sadd.s32 %s274, 1
      %s276 = scalar_select %p273, %s274, %s275
      %p279 = pneg %p273
      %p280 = scmp.eq.s32.totalorder %s23, 1
      %p281 = por %p279, %p280
      %p282 = scmp.ne.s32.totalorder %s274, %s277
      %p283 = scmp.eq.s32.totalorder %s23, 0
      %p284 = por %p282, %p283
      %p285 = scmp.ne.s32.totalorder %s274, %s277
      %p286 = scmp.eq.s32.totalorder %s28, 1
      %p287 = por %p285, %p286
      %p288 = scmp.ne.s32.totalorder %s277, %s278
      %p289 = scmp.eq.s32.totalorder %s28, 0
      %p290 = por %p288, %p289
      %p291 = scmp.ne.s32.totalorder %s277, %s278
      %p292 = scmp.eq.s32.totalorder %s29, 1
      %p293 = por %p291, %p292
      %p295 = scmp.ne.s32.totalorder %s278, %s294
      %p296 = scmp.eq.s32.totalorder %s29, 0
      %p297 = por %p295, %p296
      %p298 = scmp.le.s32.totalorder 1, %s23
      %p299 = scmp.lt.s32.totalorder %s23, 3
      %p300 = pnand %p298, %p299
      %p301 = pneg %p300
      // Predicated region
      $region9: #{onnx_model_forward.1} parent=5 // pred_check
        _
      $region10: #{onnx_model_forward.1} parent=5 // pred_check_branch
        %303 = sbr.rel (%p300) target = $region12
      $region11: #{onnx_model_forward.1} parent=5 // pred_region
        %s304 = ssub.s32 %s23, 1
        // Predicated region
        $region13: #{onnx_model_forward.1} parent=11 // pred_check
          %p305 = pneg %p110
        $region14: #{onnx_model_forward.1} parent=11 // pred_check_branch
          %307 = sbr.rel (%p305) target = $region16
        $region15: #{onnx_model_forward.1} parent=11 // pred_region
          _
        $region16: #{onnx_model_forward.1} parent=11 // pred_fallthru
          _
        // Predicated region
        $region17: #{onnx_model_forward.1} parent=11 // pred_check
          %p308 = pneg %p131
        $region18: #{onnx_model_forward.1} parent=11 // pred_check_branch
          %310 = sbr.rel (%p308) target = $region20
        $region19: #{onnx_model_forward.1} parent=11 // pred_region
          _
        $region20: #{onnx_model_forward.1} parent=11 // pred_fallthru
          _
        // Predicated region
        $region21: #{onnx_model_forward.1} parent=11 // pred_check
          %p311 = pneg %p152
        $region22: #{onnx_model_forward.1} parent=11 // pred_check_branch
          %313 = sbr.rel (%p311) target = $region24
        $region23: #{onnx_model_forward.1} parent=11 // pred_region
          _
        $region24: #{onnx_model_forward.1} parent=11 // pred_fallthru
          _
        // Predicated region
        $region25: #{onnx_model_forward.1} parent=11 // pred_check
          %p314 = pneg %p173
        $region26: #{onnx_model_forward.1} parent=11 // pred_check_branch
          %316 = sbr.rel (%p314) target = $region28
        $region27: #{onnx_model_forward.1} parent=11 // pred_region
          _
        $region28: #{onnx_model_forward.1} parent=11 // pred_fallthru
          _
        // Predicated region
        $region29: #{onnx_model_forward.1} parent=11 // pred_check
          %p317 = pneg %p194
        $region30: #{onnx_model_forward.1} parent=11 // pred_check_branch
          %319 = sbr.rel (%p317) target = $region32
        $region31: #{onnx_model_forward.1} parent=11 // pred_region
          _
        $region32: #{onnx_model_forward.1} parent=11 // pred_fallthru
          _
        // Predicated region
        $region33: #{onnx_model_forward.1} parent=11 // pred_check
          %p320 = pneg %p215
        $region34: #{onnx_model_forward.1} parent=11 // pred_check_branch
          %322 = sbr.rel (%p320) target = $region36
        $region35: #{onnx_model_forward.1} parent=11 // pred_region
          _
        $region36: #{onnx_model_forward.1} parent=11 // pred_fallthru
          _
        // Predicated region
        $region37: #{onnx_model_forward.1} parent=11 // pred_check
          %p323 = pneg %p236
        $region38: #{onnx_model_forward.1} parent=11 // pred_check_branch
          %325 = sbr.rel (%p323) target = $region40
        $region39: #{onnx_model_forward.1} parent=11 // pred_region
          _
        $region40: #{onnx_model_forward.1} parent=11 // pred_fallthru
          _
      $region12: #{onnx_model_forward.1} parent=5 // pred_fallthru
        _
      %p326 = scmp.lt.s32.totalorder %s23, 2
      // Predicated region
      $region41: #{onnx_model_forward.1} parent=5 // pred_check
        %p327 = pneg %p326
      $region42: #{onnx_model_forward.1} parent=5 // pred_check_branch
        %329 = sbr.rel (%p327) target = $region44
      $region43: #{onnx_model_forward.1} parent=5 // pred_region
        // Predicated region
        $region45: #{onnx_model_forward.1} parent=43 // pred_check
          %p330 = pneg %p55
        $region46: #{onnx_model_forward.1} parent=43 // pred_check_branch
          %332 = sbr.rel (%p330) target = $region48
        $region47: #{onnx_model_forward.1} parent=43 // pred_region
          %p333 = scmp.lt.s32.totalorder %s30, 1
          %s334 = scalar_select %p333, %s30, 1
          %s335 = smul.addr %s334, 8
          %s336 = smul.addr %s335, 8
          %s337 = scalar_lea.vmem %s0, %s336
        $region48: #{onnx_model_forward.1} parent=43 // pred_fallthru
          _
        // Predicated region
        $region49: #{onnx_model_forward.1} parent=43 // pred_check
          %p338 = pneg %p83
        $region50: #{onnx_model_forward.1} parent=43 // pred_check_branch
          %340 = sbr.rel (%p338) target = $region52
        $region51: #{onnx_model_forward.1} parent=43 // pred_region
          %s341 = smul.u32 64, %s31
          %p342 = scmp.lt.s32.totalorder %s30, 1
          %s343 = scalar_select %p342, %s30, 1
          %p344 = scmp.lt.s32.totalorder %s341, 63
          %s345 = scalar_select %p344, %s341, 63
          %s346 = smul.addr %s343, 64
          %s347 = sadd.s32 %s345, %s346
          %s348 = smul.addr %s347, 4
          %s349 = scalar_lea.vmem %s1, %s348
          %s350 = smul.u32 64, %s31
        $region52: #{onnx_model_forward.1} parent=43 // pred_fallthru
          _
      $region44: #{onnx_model_forward.1} parent=5 // pred_fallthru
        _
      %p351 = scmp.le.s32.totalorder 1, %s23
      %p352 = scmp.lt.s32.totalorder %s23, 3
      %p353 = pnand %p351, %p352
      %p354 = pneg %p353
      // Predicated region
      $region53: #{onnx_model_forward.1} parent=5 // pred_check
        _
      $region54: #{onnx_model_forward.1} parent=5 // pred_check_branch
        %356 = sbr.rel (%p353) target = $region56
      $region55: #{onnx_model_forward.1} parent=5 // pred_region
        %s357 = ssub.s32 %s23, 1
        %p358 = scmp.lt.s32.totalorder %s32, 1
        %s359 = scalar_select %p358, %s32, 1
        %s360 = smul.addr %s359, 8
        %s361 = smul.addr %s360, 8
        %s362 = scalar_lea.vmem %s0, %s361
        %p363 = pneg %p61
        %p364 = pneg %p58
        %s365 = smul.u32 64, %s33
        %p366 = scmp.lt.s32.totalorder %s32, 1
        %s367 = scalar_select %p366, %s32, 1
        %p368 = scmp.lt.s32.totalorder %s365, 63
        %s369 = scalar_select %p368, %s365, 63
        %s370 = smul.addr %s367, 64
        %s371 = sadd.s32 %s369, %s370
        %s372 = smul.addr %s371, 4
        %s373 = scalar_lea.vmem %s1, %s372
        %p374 = pneg %p89
        %p375 = pneg %p86
        %p376 = pneg %p110
        %p377 = pneg %p107
        %p378 = pneg %p131
        %p379 = pneg %p128
        %p380 = pneg %p152
        %p381 = pneg %p149
        %p382 = pneg %p173
        %p383 = pneg %p170
        %p384 = pneg %p194
        %p385 = pneg %p191
        %p386 = pneg %p215
        %p387 = pneg %p212
        %p388 = pneg %p236
        %p389 = pneg %p233
        %p390 = pneg %p264
        %p391 = pneg %p261
        %s392 = sand.u32 %s251, 1
        %s393 = scalar_lea.sflag [#allocation4], %s392
        %s394 = sand.u32 %s251, 1
        %s395 = smul.addr %s394, 256
        %s396 = scalar_lea.vmem [#allocation3], %s395
        %p397 = pneg %p290
        %p398 = pneg %p287
        %s399 = sand.u32 %s277, 1
        %s400 = scalar_lea.sflag [#allocation6], %s399
        %s401 = sand.u32 %s277, 1
        %s402 = scalar_lea.vmem [#allocation5], %s401
        %p403 = scmp.lt.s32.totalorder %s32, 1
        %s404 = scalar_select %p403, %s32, 1
        %s405 = smul.addr %s404, 8
        %s406 = smul.addr %s405, 8
        %s407 = scalar_lea.vmem %s0, %s406
        %s408 = smul.u32 64, %s33
        %p409 = scmp.lt.s32.totalorder %s32, 1
        %s410 = scalar_select %p409, %s32, 1
        %p411 = scmp.lt.s32.totalorder %s408, 63
        %s412 = scalar_select %p411, %s408, 63
        %s413 = smul.addr %s410, 64
        %s414 = sadd.s32 %s412, %s413
        %s415 = smul.addr %s414, 4
        %s416 = scalar_lea.vmem %s1, %s415
        %s417 = smul.u32 64, %s33
        %s418 = smul.u32 64, %s33
        %p420 = scmp.eq.s32.totalorder %s33, 0
        // Predicated region
        $region57: #{onnx_model_forward.1} parent=55 // pred_check
          %p421 = pneg %p420
        $region58: #{onnx_model_forward.1} parent=55 // pred_check_branch
          %423 = sbr.rel (%p421) target = $region60
        $region59: #{onnx_model_forward.1} parent=55 // pred_region
          %v424 = vld [vmem:[%s407] sm:$0xff]
          %v425 = vld [vmem:[%s407 + $0x8] sm:$0xff]
          %v426 = vld [vmem:[%s407 + $0x10] sm:$0xff]
          %v427 = vld [vmem:[%s407 + $0x18] sm:$0xff]
          %v428 = vld [vmem:[%s407 + $0x20] sm:$0xff]
          %v429 = vld [vmem:[%s407 + $0x28] sm:$0xff]
          %v430 = vld [vmem:[%s407 + $0x30] sm:$0xff]
          %v431 = vld [vmem:[%s407 + $0x38] sm:$0xff]
          %v432 = vadd.f32 %v424, %v425
          %v433 = vadd.f32 %v432, %v426
          %v434 = vadd.f32 %v433, %v427
          %v435 = vadd.f32 %v434, %v428
          %v436 = vadd.f32 %v435, %v429
          %v437 = vadd.f32 %v436, %v430
          %v438 = vadd.f32 %v437, %v431
          %v439 = vrot.slane %v438, 4
          %v440 = vadd.f32 %v438, %v439
          %v441 = vrot.slane %v440, 2
          %v442 = vadd.f32 %v440, %v441
          %v443 = vrot.slane %v442, 1
          %v444 = vadd.f32 %v442, %v443
          %v445 = vrcp.pop 64.0
          %v446 = vmul.f32 %v444, %v445
          %v447 = vpack.c.bf16 %v446, %v446
          %v448 = vld [vmem:[%s2] sm:$0xf]
          %v449 = vld [vmem:[%s2 + $0x4] sm:$0xf]
          %v450 = vld [vmem:[%s2 + $0x8] sm:$0xf]
          %v451 = vld [vmem:[%s2 + $0xc] sm:$0xf]
          %v452 = vld [vmem:[%s2 + $0x10] sm:$0xf]
          %v453 = vld [vmem:[%s2 + $0x14] sm:$0xf]
          %v454 = vld [vmem:[%s2 + $0x18] sm:$0xf]
          %v455 = vld [vmem:[%s2 + $0x1c] sm:$0xf]
          %v456 = vld [vmem:[%s2 + $0x20] sm:$0xf]
          %v457 = vld [vmem:[%s2 + $0x24] sm:$0xf]
          %v458 = vld [vmem:[%s2 + $0x28] sm:$0xf]
          %v459 = vld [vmem:[%s2 + $0x2c] sm:$0xf]
          %v460 = vld [vmem:[%s2 + $0x30] sm:$0xf]
          %v461 = vld [vmem:[%s2 + $0x34] sm:$0xf]
          %v462 = vld [vmem:[%s2 + $0x38] sm:$0xf]
          %v463 = vld [vmem:[%s2 + $0x3c] sm:$0xf]
          %v464 = vld [vmem:[%s3] sm:$0x1]
          %v481 = vunpack.c.l.b16 %v448
          %v482 = vunpack.c.l.b16 %v449
          %v483 = vunpack.c.l.b16 %v450
          %v484 = vunpack.c.l.b16 %v451
          %v485 = vunpack.c.l.b16 %v452
          %v486 = vunpack.c.l.b16 %v453
          %v487 = vunpack.c.l.b16 %v454
          %v488 = vunpack.c.l.b16 %v455
          %v489 = vunpack.c.l.b16 %v456
          %v490 = vunpack.c.l.b16 %v457
          %v491 = vunpack.c.l.b16 %v458
          %v492 = vunpack.c.l.b16 %v459
          %v493 = vunpack.c.l.b16 %v460
          %v494 = vunpack.c.l.b16 %v461
          %v495 = vunpack.c.l.b16 %v462
          %v496 = vunpack.c.l.b16 %v463
          %v497 = vpack.c.b16 %v482, %v481
          %v498 = vpack.c.b16 %v484, %v483
          %v499 = vpack.c.b16 %v486, %v485
          %v500 = vpack.c.b16 %v488, %v487
          %v501 = vpack.c.b16 %v490, %v489
          %v502 = vpack.c.b16 %v492, %v491
          %v503 = vpack.c.b16 %v494, %v493
          %v504 = vpack.c.b16 %v496, %v495
          %513 = vmatprep.subr.bf16.mxu0 0
          %514 = vmatpush1.bf16.msra.mxu0 %v504
          %515 = vmatprep.subr.bf16.mxu0 0
          %516 = vmatpush1.bf16.msra.mxu0 %v503
          %517 = vmatprep.subr.bf16.mxu0 0
          %518 = vmatpush1.bf16.msra.mxu0 %v502
          %519 = vmatprep.subr.bf16.mxu0 0
          %520 = vmatpush1.bf16.msra.mxu0 %v501
          %521 = vmatprep.subr.bf16.mxu0 0
          %522 = vmatpush1.bf16.msra.mxu0 %v500
          %523 = vmatprep.subr.bf16.mxu0 0
          %524 = vmatpush1.bf16.msra.mxu0 %v499
          %525 = vmatprep.subr.bf16.mxu0 0
          %526 = vmatpush1.bf16.msra.mxu0 %v498
          %527 = vmatprep.subr.bf16.mxu0 0
          %528 = vmatpush1.bf16.msra.mxu0 %v497
          %529 = vmatprep.subr.bf16.mxu0 0
          %530 = vmatpush2.bf16.msra.mxu0 0
          %531 = vmatprep.subr.bf16.mxu0 0
          %532 = vmatpush2.bf16.msra.mxu0 0
          %533 = vmatprep.subr.bf16.mxu0 0
          %534 = vmatpush2.bf16.msra.mxu0 0
          %535 = vmatprep.subr.bf16.mxu0 0
          %536 = vmatpush2.bf16.msra.mxu0 0
          %537 = vmatprep.subr.bf16.mxu0 0
          %538 = vmatpush2.bf16.msra.mxu0 0
          %539 = vmatprep.subr.bf16.mxu0 0
          %540 = vmatpush2.bf16.msra.mxu0 0
          %541 = vmatprep.subr.bf16.mxu0 0
          %542 = vmatpush2.bf16.msra.mxu0 0
          %543 = vmatprep.subr.bf16.mxu0 0
          %544 = vmatpush2.bf16.msra.mxu0 0
          %545 = vmatprep.mubr.bf16.mxu0 0
          %546 = vmatmul.mubr.bf16.gmra.mxu0 %v447
          %v547 = vpop.f32.mrf.mxu0
          %v548 = vadd.f32 %v464, %v547
          %v549 = vpop.f32.mrf.mxu0
          %v550 = vpop.f32.mrf.mxu0
          %v551 = vpop.f32.mrf.mxu0
          %552 = vdwg.mxu0
          %v553 = vmax.f32 %v548, 0.0
          %v554 = vpack.c.bf16 %v553, %v553
          %v555 = vld [vmem:[%s4] sm:$0xf]
          %v556 = vld [vmem:[%s4 + $0x4] sm:$0xf]
          %v557 = vld [vmem:[%s4 + $0x8] sm:$0xf]
          %v558 = vld [vmem:[%s4 + $0xc] sm:$0xf]
          %v559 = vld [vmem:[%s4 + $0x10] sm:$0xf]
          %v560 = vld [vmem:[%s4 + $0x14] sm:$0xf]
          %v561 = vld [vmem:[%s4 + $0x18] sm:$0xf]
          %v562 = vld [vmem:[%s4 + $0x1c] sm:$0xf]
          %v563 = vld [vmem:[%s4 + $0x20] sm:$0xf]
          %v564 = vld [vmem:[%s4 + $0x24] sm:$0xf]
          %v565 = vld [vmem:[%s4 + $0x28] sm:$0xf]
          %v566 = vld [vmem:[%s4 + $0x2c] sm:$0xf]
          %v567 = vld [vmem:[%s4 + $0x30] sm:$0xf]
          %v568 = vld [vmem:[%s4 + $0x34] sm:$0xf]
          %v569 = vld [vmem:[%s4 + $0x38] sm:$0xf]
          %v570 = vld [vmem:[%s4 + $0x3c] sm:$0xf]
          %v587 = vunpack.c.l.b16 %v555
          %v588 = vunpack.c.l.b16 %v556
          %v589 = vunpack.c.l.b16 %v557
          %v590 = vunpack.c.l.b16 %v558
          %v591 = vunpack.c.l.b16 %v559
          %v592 = vunpack.c.l.b16 %v560
          %v593 = vunpack.c.l.b16 %v561
          %v594 = vunpack.c.l.b16 %v562
          %v595 = vunpack.c.l.b16 %v563
          %v596 = vunpack.c.l.b16 %v564
          %v597 = vunpack.c.l.b16 %v565
          %v598 = vunpack.c.l.b16 %v566
          %v599 = vunpack.c.l.b16 %v567
          %v600 = vunpack.c.l.b16 %v568
          %v601 = vunpack.c.l.b16 %v569
          %v602 = vunpack.c.l.b16 %v570
          %v603 = vpack.c.b16 %v588, %v587
          %v604 = vpack.c.b16 %v590, %v589
          %v605 = vpack.c.b16 %v592, %v591
          %v606 = vpack.c.b16 %v594, %v593
          %v607 = vpack.c.b16 %v596, %v595
          %v608 = vpack.c.b16 %v598, %v597
          %v609 = vpack.c.b16 %v600, %v599
          %v610 = vpack.c.b16 %v602, %v601
          %619 = vmatprep.subr.bf16.mxu0 0
          %620 = vmatpush1.bf16.msra.mxu0 %v610
          %621 = vmatprep.subr.bf16.mxu0 0
          %622 = vmatpush1.bf16.msra.mxu0 %v609
          %623 = vmatprep.subr.bf16.mxu0 0
          %624 = vmatpush1.bf16.msra.mxu0 %v608
          %625 = vmatprep.subr.bf16.mxu0 0
          %626 = vmatpush1.bf16.msra.mxu0 %v607
          %627 = vmatprep.subr.bf16.mxu0 0
          %628 = vmatpush1.bf16.msra.mxu0 %v606
          %629 = vmatprep.subr.bf16.mxu0 0
          %630 = vmatpush1.bf16.msra.mxu0 %v605
          %631 = vmatprep.subr.bf16.mxu0 0
          %632 = vmatpush1.bf16.msra.mxu0 %v604
          %633 = vmatprep.subr.bf16.mxu0 0
          %634 = vmatpush1.bf16.msra.mxu0 %v603
          %635 = vmatprep.subr.bf16.mxu0 0
          %636 = vmatpush2.bf16.msra.mxu0 0
          %637 = vmatprep.subr.bf16.mxu0 0
          %638 = vmatpush2.bf16.msra.mxu0 0
          %639 = vmatprep.subr.bf16.mxu0 0
          %640 = vmatpush2.bf16.msra.mxu0 0
          %641 = vmatprep.subr.bf16.mxu0 0
          %642 = vmatpush2.bf16.msra.mxu0 0
          %643 = vmatprep.subr.bf16.mxu0 0
          %644 = vmatpush2.bf16.msra.mxu0 0
          %645 = vmatprep.subr.bf16.mxu0 0
          %646 = vmatpush2.bf16.msra.mxu0 0
          %647 = vmatprep.subr.bf16.mxu0 0
          %648 = vmatpush2.bf16.msra.mxu0 0
          %649 = vmatprep.subr.bf16.mxu0 0
          %650 = vmatpush2.bf16.msra.mxu0 0
          %651 = vmatprep.mubr.bf16.mxu0 0
          %652 = vmatmul.mubr.bf16.gmra.mxu0 %v554
          %v653 = vpop.f32.mrf.mxu0
          %v654 = vadd.f32 0.0, %v653
          %v655 = vpop.f32.mrf.mxu0
          %v656 = vpop.f32.mrf.mxu0
          %v657 = vpop.f32.mrf.mxu0
          %658 = vdwg.mxu0
          %v659 = vxor.u32 %v654, 2147483648
          %v660 = vmul.f32 %v659, 1.442695
          %v661 = vpow.pop %v660
          %v662 = vadd.f32 %v661, 1.0
          %v663 = vrcp.pop %v662
          %v664 = vmul.f32 1.0, %v663
          %665 = vst [vmem:[#allocation2] sm:$0x1] %v664
          %666 = vst [vmem:[%s402] sm:$0x1] %v553
        $region60: #{onnx_model_forward.1} parent=55 // pred_fallthru
          _
        %v667 = vld [vmem:[%s416] sm:$0xf]
        %v668 = vld [vmem:[%s416 + $0x4] sm:$0xf]
        %v669 = vld [vmem:[%s416 + $0x8] sm:$0xf]
        %v670 = vld [vmem:[%s416 + $0xc] sm:$0xf]
        %v671 = vld [vmem:[%s416 + $0x10] sm:$0xf]
        %v672 = vld [vmem:[%s416 + $0x14] sm:$0xf]
        %v673 = vld [vmem:[%s416 + $0x18] sm:$0xf]
        %v674 = vld [vmem:[%s416 + $0x1c] sm:$0xf]
        %v675 = vld [vmem:[%s416 + $0x20] sm:$0xf]
        %v676 = vld [vmem:[%s416 + $0x24] sm:$0xf]
        %v677 = vld [vmem:[%s416 + $0x28] sm:$0xf]
        %v678 = vld [vmem:[%s416 + $0x2c] sm:$0xf]
        %v679 = vld [vmem:[%s416 + $0x30] sm:$0xf]
        %v680 = vld [vmem:[%s416 + $0x34] sm:$0xf]
        %v681 = vld [vmem:[%s416 + $0x38] sm:$0xf]
        %v682 = vld [vmem:[%s416 + $0x3c] sm:$0xf]
        %v683 = vld [vmem:[%s416 + $0x40] sm:$0xf]
        %v684 = vld [vmem:[%s416 + $0x44] sm:$0xf]
        %v685 = vld [vmem:[%s416 + $0x48] sm:$0xf]
        %v686 = vld [vmem:[%s416 + $0x4c] sm:$0xf]
        %v687 = vld [vmem:[%s416 + $0x50] sm:$0xf]
        %v688 = vld [vmem:[%s416 + $0x54] sm:$0xf]
        %v689 = vld [vmem:[%s416 + $0x58] sm:$0xf]
        %v690 = vld [vmem:[%s416 + $0x5c] sm:$0xf]
        %v691 = vld [vmem:[%s416 + $0x60] sm:$0xf]
        %v692 = vld [vmem:[%s416 + $0x64] sm:$0xf]
        %v693 = vld [vmem:[%s416 + $0x68] sm:$0xf]
        %v694 = vld [vmem:[%s416 + $0x6c] sm:$0xf]
        %v695 = vld [vmem:[%s416 + $0x70] sm:$0xf]
        %v696 = vld [vmem:[%s416 + $0x74] sm:$0xf]
        %v697 = vld [vmem:[%s416 + $0x78] sm:$0xf]
        %v698 = vld [vmem:[%s416 + $0x7c] sm:$0xf]
        %v699 = vld [vmem:[%s416 + $0x80] sm:$0xf]
        %v700 = vld [vmem:[%s416 + $0x84] sm:$0xf]
        %v701 = vld [vmem:[%s416 + $0x88] sm:$0xf]
        %v702 = vld [vmem:[%s416 + $0x8c] sm:$0xf]
        %v703 = vld [vmem:[%s416 + $0x90] sm:$0xf]
        %v704 = vld [vmem:[%s416 + $0x94] sm:$0xf]
        %v705 = vld [vmem:[%s416 + $0x98] sm:$0xf]
        %v706 = vld [vmem:[%s416 + $0x9c] sm:$0xf]
        %v707 = vld [vmem:[%s416 + $0xa0] sm:$0xf]
        %v708 = vld [vmem:[%s416 + $0xa4] sm:$0xf]
        %v709 = vld [vmem:[%s416 + $0xa8] sm:$0xf]
        %v710 = vld [vmem:[%s416 + $0xac] sm:$0xf]
        %v711 = vld [vmem:[%s416 + $0xb0] sm:$0xf]
        %v712 = vld [vmem:[%s416 + $0xb4] sm:$0xf]
        %v713 = vld [vmem:[%s416 + $0xb8] sm:$0xf]
        %v714 = vld [vmem:[%s416 + $0xbc] sm:$0xf]
        %v715 = vld [vmem:[%s416 + $0xc0] sm:$0xf]
        %v716 = vld [vmem:[%s416 + $0xc4] sm:$0xf]
        %v717 = vld [vmem:[%s416 + $0xc8] sm:$0xf]
        %v718 = vld [vmem:[%s416 + $0xcc] sm:$0xf]
        %v719 = vld [vmem:[%s416 + $0xd0] sm:$0xf]
        %v720 = vld [vmem:[%s416 + $0xd4] sm:$0xf]
        %v721 = vld [vmem:[%s416 + $0xd8] sm:$0xf]
        %v722 = vld [vmem:[%s416 + $0xdc] sm:$0xf]
        %v723 = vld [vmem:[%s416 + $0xe0] sm:$0xf]
        %v724 = vld [vmem:[%s416 + $0xe4] sm:$0xf]
        %v725 = vld [vmem:[%s416 + $0xe8] sm:$0xf]
        %v726 = vld [vmem:[%s416 + $0xec] sm:$0xf]
        %v727 = vld [vmem:[%s416 + $0xf0] sm:$0xf]
        %v728 = vld [vmem:[%s416 + $0xf4] sm:$0xf]
        %v729 = vld [vmem:[%s416 + $0xf8] sm:$0xf]
        %v730 = vld [vmem:[%s416 + $0xfc] sm:$0xf]
        %v731 = vld [vmem:[%s5] sm:$0xf]
        %v732 = vld [vmem:[%s5 + $0x4] sm:$0xf]
        %v733 = vld [vmem:[%s5 + $0x8] sm:$0xf]
        %v734 = vld [vmem:[%s5 + $0xc] sm:$0xf]
        %v735 = vld [vmem:[%s5 + $0x10] sm:$0xf]
        %v736 = vld [vmem:[%s5 + $0x14] sm:$0xf]
        %v737 = vld [vmem:[%s5 + $0x18] sm:$0xf]
        %v738 = vld [vmem:[%s5 + $0x1c] sm:$0xf]
        %v739 = vld [vmem:[%s5 + $0x20] sm:$0xf]
        %v740 = vld [vmem:[%s5 + $0x24] sm:$0xf]
        %v741 = vld [vmem:[%s5 + $0x28] sm:$0xf]
        %v742 = vld [vmem:[%s5 + $0x2c] sm:$0xf]
        %v743 = vld [vmem:[%s5 + $0x30] sm:$0xf]
        %v744 = vld [vmem:[%s5 + $0x34] sm:$0xf]
        %v745 = vld [vmem:[%s5 + $0x38] sm:$0xf]
        %v746 = vld [vmem:[%s5 + $0x3c] sm:$0xf]
        %v747 = vld [vmem:[%s6] sm:$0x1]
        %v749 = vlaneseq
        %v750 = vshrl.u32 %v749, 7
        %v751 = vsub.s32 0, %v750
        %v752 = vrot.slane %v747, %v751
        %v818 = vunpack.c.l.b16 %v667
        %v819 = vunpack.c.l.b16 %v668
        %v820 = vunpack.c.l.b16 %v669
        %v821 = vunpack.c.l.b16 %v670
        %v822 = vunpack.c.l.b16 %v671
        %v823 = vunpack.c.l.b16 %v672
        %v824 = vunpack.c.l.b16 %v673
        %v825 = vunpack.c.l.b16 %v674
        %v826 = vunpack.c.l.b16 %v675
        %v827 = vunpack.c.l.b16 %v676
        %v828 = vunpack.c.l.b16 %v677
        %v829 = vunpack.c.l.b16 %v678
        %v830 = vunpack.c.l.b16 %v679
        %v831 = vunpack.c.l.b16 %v680
        %v832 = vunpack.c.l.b16 %v681
        %v833 = vunpack.c.l.b16 %v682
        %v834 = vunpack.c.l.b16 %v683
        %v835 = vunpack.c.l.b16 %v684
        %v836 = vunpack.c.l.b16 %v685
        %v837 = vunpack.c.l.b16 %v686
        %v838 = vunpack.c.l.b16 %v687
        %v839 = vunpack.c.l.b16 %v688
        %v840 = vunpack.c.l.b16 %v689
        %v841 = vunpack.c.l.b16 %v690
        %v842 = vunpack.c.l.b16 %v691
        %v843 = vunpack.c.l.b16 %v692
        %v844 = vunpack.c.l.b16 %v693
        %v845 = vunpack.c.l.b16 %v694
        %v846 = vunpack.c.l.b16 %v695
        %v847 = vunpack.c.l.b16 %v696
        %v848 = vunpack.c.l.b16 %v697
        %v849 = vunpack.c.l.b16 %v698
        %v850 = vunpack.c.l.b16 %v699
        %v851 = vunpack.c.l.b16 %v700
        %v852 = vunpack.c.l.b16 %v701
        %v853 = vunpack.c.l.b16 %v702
        %v854 = vunpack.c.l.b16 %v703
        %v855 = vunpack.c.l.b16 %v704
        %v856 = vunpack.c.l.b16 %v705
        %v857 = vunpack.c.l.b16 %v706
        %v858 = vunpack.c.l.b16 %v707
        %v859 = vunpack.c.l.b16 %v708
        %v860 = vunpack.c.l.b16 %v709
        %v861 = vunpack.c.l.b16 %v710
        %v862 = vunpack.c.l.b16 %v711
        %v863 = vunpack.c.l.b16 %v712
        %v864 = vunpack.c.l.b16 %v713
        %v865 = vunpack.c.l.b16 %v714
        %v866 = vunpack.c.l.b16 %v715
        %v867 = vunpack.c.l.b16 %v716
        %v868 = vunpack.c.l.b16 %v717
        %v869 = vunpack.c.l.b16 %v718
        %v870 = vunpack.c.l.b16 %v719
        %v871 = vunpack.c.l.b16 %v720
        %v872 = vunpack.c.l.b16 %v721
        %v873 = vunpack.c.l.b16 %v722
        %v874 = vunpack.c.l.b16 %v723
        %v875 = vunpack.c.l.b16 %v724
        %v876 = vunpack.c.l.b16 %v725
        %v877 = vunpack.c.l.b16 %v726
        %v878 = vunpack.c.l.b16 %v727
        %v879 = vunpack.c.l.b16 %v728
        %v880 = vunpack.c.l.b16 %v729
        %v881 = vunpack.c.l.b16 %v730
        %v882 = vpack.c.b16 %v819, %v818
        %v883 = vpack.c.b16 %v821, %v820
        %v884 = vpack.c.b16 %v823, %v822
        %v885 = vpack.c.b16 %v825, %v824
        %v886 = vpack.c.b16 %v827, %v826
        %v887 = vpack.c.b16 %v829, %v828
        %v888 = vpack.c.b16 %v831, %v830
        %v889 = vpack.c.b16 %v833, %v832
        %v890 = vpack.c.b16 %v835, %v834
        %v891 = vpack.c.b16 %v837, %v836
        %v892 = vpack.c.b16 %v839, %v838
        %v893 = vpack.c.b16 %v841, %v840
        %v894 = vpack.c.b16 %v843, %v842
        %v895 = vpack.c.b16 %v845, %v844
        %v896 = vpack.c.b16 %v847, %v846
        %v897 = vpack.c.b16 %v849, %v848
        %v898 = vpack.c.b16 %v851, %v850
        %v899 = vpack.c.b16 %v853, %v852
        %v900 = vpack.c.b16 %v855, %v854
        %v901 = vpack.c.b16 %v857, %v856
        %v902 = vpack.c.b16 %v859, %v858
        %v903 = vpack.c.b16 %v861, %v860
        %v904 = vpack.c.b16 %v863, %v862
        %v905 = vpack.c.b16 %v865, %v864
        %v906 = vpack.c.b16 %v867, %v866
        %v907 = vpack.c.b16 %v869, %v868
        %v908 = vpack.c.b16 %v871, %v870
        %v909 = vpack.c.b16 %v873, %v872
        %v910 = vpack.c.b16 %v875, %v874
        %v911 = vpack.c.b16 %v877, %v876
        %v912 = vpack.c.b16 %v879, %v878
        %v913 = vpack.c.b16 %v881, %v880
        %v962 = vunpack.c.l.b16 %v731
        %v963 = vunpack.c.l.b16 %v732
        %v964 = vunpack.c.l.b16 %v733
        %v965 = vunpack.c.l.b16 %v734
        %v966 = vunpack.c.l.b16 %v735
        %v967 = vunpack.c.l.b16 %v736
        %v968 = vunpack.c.l.b16 %v737
        %v969 = vunpack.c.l.b16 %v738
        %v970 = vunpack.c.l.b16 %v739
        %v971 = vunpack.c.l.b16 %v740
        %v972 = vunpack.c.l.b16 %v741
        %v973 = vunpack.c.l.b16 %v742
        %v974 = vunpack.c.l.b16 %v743
        %v975 = vunpack.c.l.b16 %v744
        %v976 = vunpack.c.l.b16 %v745
        %v977 = vunpack.c.l.b16 %v746
        %v978 = vpack.c.b16 %v963, %v962
        %v979 = vpack.c.b16 %v965, %v964
        %v980 = vpack.c.b16 %v967, %v966
        %v981 = vpack.c.b16 %v969, %v968
        %v982 = vpack.c.b16 %v971, %v970
        %v983 = vpack.c.b16 %v973, %v972
        %v984 = vpack.c.b16 %v975, %v974
        %v985 = vpack.c.b16 %v977, %v976
        %994 = vmatprep.subr.bf16.mxu0 0
        %995 = vmatpush1.bf16.msra.mxu0 %v985
        %996 = vmatprep.subr.bf16.mxu0 0
        %997 = vmatpush1.bf16.msra.mxu0 %v984
        %998 = vmatprep.subr.bf16.mxu0 0
        %999 = vmatpush1.bf16.msra.mxu0 %v983
        %1000 = vmatprep.subr.bf16.mxu0 0
        %1001 = vmatpush1.bf16.msra.mxu0 %v982
        %1002 = vmatprep.subr.bf16.mxu0 0
        %1003 = vmatpush1.bf16.msra.mxu0 %v981
        %1004 = vmatprep.subr.bf16.mxu0 0
        %1005 = vmatpush1.bf16.msra.mxu0 %v980
        %1006 = vmatprep.subr.bf16.mxu0 0
        %1007 = vmatpush1.bf16.msra.mxu0 %v979
        %1008 = vmatprep.subr.bf16.mxu0 0
        %1009 = vmatpush1.bf16.msra.mxu0 %v978
        %1010 = vmatprep.subr.bf16.mxu0 0
        %1011 = vmatpush2.bf16.msra.mxu0 0
        %1012 = vmatprep.subr.bf16.mxu0 0
        %1013 = vmatpush2.bf16.msra.mxu0 0
        %1014 = vmatprep.subr.bf16.mxu0 0
        %1015 = vmatpush2.bf16.msra.mxu0 0
        %1016 = vmatprep.subr.bf16.mxu0 0
        %1017 = vmatpush2.bf16.msra.mxu0 0
        %1018 = vmatprep.subr.bf16.mxu0 0
        %1019 = vmatpush2.bf16.msra.mxu0 0
        %1020 = vmatprep.subr.bf16.mxu0 0
        %1021 = vmatpush2.bf16.msra.mxu0 0
        %1022 = vmatprep.subr.bf16.mxu0 0
        %1023 = vmatpush2.bf16.msra.mxu0 0
        %1024 = vmatprep.subr.bf16.mxu0 0
        %1025 = vmatpush2.bf16.msra.mxu0 0
        %1026 = vmatprep.mubr.bf16.mxu0 0
        %1027 = vmatmul.mubr.bf16.gmra.mxu0 %v882
        %v1028 = vpop.f32.mrf.mxu0
        %v1029 = vadd.f32 %v752, %v1028
        %v1030 = vpop.f32.mrf.mxu0
        %v1031 = vpop.f32.mrf.mxu0
        %v1032 = vadd.f32 %v752, %v1031
        %v1033 = vpop.f32.mrf.mxu0
        %1034 = vmatprep.mubr.bf16.mxu0 0
        %1035 = vmatmul.mubr.bf16.gmra.mxu0 %v883
        %v1036 = vpop.f32.mrf.mxu0
        %v1037 = vadd.f32 %v752, %v1036
        %v1038 = vpop.f32.mrf.mxu0
        %v1039 = vpop.f32.mrf.mxu0
        %v1040 = vadd.f32 %v752, %v1039
        %v1041 = vpop.f32.mrf.mxu0
        %1042 = vmatprep.mubr.bf16.mxu0 0
        %1043 = vmatmul.mubr.bf16.gmra.mxu0 %v884
        %v1044 = vpop.f32.mrf.mxu0
        %v1045 = vadd.f32 %v752, %v1044
        %v1046 = vpop.f32.mrf.mxu0
        %v1047 = vpop.f32.mrf.mxu0
        %v1048 = vadd.f32 %v752, %v1047
        %v1049 = vpop.f32.mrf.mxu0
        %1050 = vmatprep.mubr.bf16.mxu0 0
        %1051 = vmatmul.mubr.bf16.gmra.mxu0 %v885
        %v1052 = vpop.f32.mrf.mxu0
        %v1053 = vadd.f32 %v752, %v1052
        %v1054 = vpop.f32.mrf.mxu0
        %v1055 = vpop.f32.mrf.mxu0
        %v1056 = vadd.f32 %v752, %v1055
        %v1057 = vpop.f32.mrf.mxu0
        %1058 = vmatprep.mubr.bf16.mxu0 0
        %1059 = vmatmul.mubr.bf16.gmra.mxu0 %v886
        %v1060 = vpop.f32.mrf.mxu0
        %v1061 = vadd.f32 %v752, %v1060
        %v1062 = vpop.f32.mrf.mxu0
        %v1063 = vpop.f32.mrf.mxu0
        %v1064 = vadd.f32 %v752, %v1063
        %v1065 = vpop.f32.mrf.mxu0
        %1066 = vmatprep.mubr.bf16.mxu0 0
        %1067 = vmatmul.mubr.bf16.gmra.mxu0 %v887
        %v1068 = vpop.f32.mrf.mxu0
        %v1069 = vadd.f32 %v752, %v1068
        %v1070 = vpop.f32.mrf.mxu0
        %v1071 = vpop.f32.mrf.mxu0
        %v1072 = vadd.f32 %v752, %v1071
        %v1073 = vpop.f32.mrf.mxu0
        %1074 = vmatprep.mubr.bf16.mxu0 0
        %1075 = vmatmul.mubr.bf16.gmra.mxu0 %v888
        %v1076 = vpop.f32.mrf.mxu0
        %v1077 = vadd.f32 %v752, %v1076
        %v1078 = vpop.f32.mrf.mxu0
        %v1079 = vpop.f32.mrf.mxu0
        %v1080 = vadd.f32 %v752, %v1079
        %v1081 = vpop.f32.mrf.mxu0
        %1082 = vmatprep.mubr.bf16.mxu0 0
        %1083 = vmatmul.mubr.bf16.gmra.mxu0 %v889
        %v1084 = vpop.f32.mrf.mxu0
        %v1085 = vadd.f32 %v752, %v1084
        %v1086 = vpop.f32.mrf.mxu0
        %v1087 = vpop.f32.mrf.mxu0
        %v1088 = vadd.f32 %v752, %v1087
        %v1089 = vpop.f32.mrf.mxu0
        %1090 = vmatprep.mubr.bf16.mxu0 0
        %1091 = vmatmul.mubr.bf16.gmra.mxu0 %v890
        %v1092 = vpop.f32.mrf.mxu0
        %v1093 = vadd.f32 %v752, %v1092
        %v1094 = vpop.f32.mrf.mxu0
        %v1095 = vpop.f32.mrf.mxu0
        %v1096 = vadd.f32 %v752, %v1095
        %v1097 = vpop.f32.mrf.mxu0
        %1098 = vmatprep.mubr.bf16.mxu0 0
        %1099 = vmatmul.mubr.bf16.gmra.mxu0 %v891
        %v1100 = vpop.f32.mrf.mxu0
        %v1101 = vadd.f32 %v752, %v1100
        %v1102 = vpop.f32.mrf.mxu0
        %v1103 = vpop.f32.mrf.mxu0
        %v1104 = vadd.f32 %v752, %v1103
        %v1105 = vpop.f32.mrf.mxu0
        %1106 = vmatprep.mubr.bf16.mxu0 0
        %1107 = vmatmul.mubr.bf16.gmra.mxu0 %v892
        %v1108 = vpop.f32.mrf.mxu0
        %v1109 = vadd.f32 %v752, %v1108
        %v1110 = vpop.f32.mrf.mxu0
        %v1111 = vpop.f32.mrf.mxu0
        %v1112 = vadd.f32 %v752, %v1111
        %v1113 = vpop.f32.mrf.mxu0
        %1114 = vmatprep.mubr.bf16.mxu0 0
        %1115 = vmatmul.mubr.bf16.gmra.mxu0 %v893
        %v1116 = vpop.f32.mrf.mxu0
        %v1117 = vadd.f32 %v752, %v1116
        %v1118 = vpop.f32.mrf.mxu0
        %v1119 = vpop.f32.mrf.mxu0
        %v1120 = vadd.f32 %v752, %v1119
        %v1121 = vpop.f32.mrf.mxu0
        %1122 = vmatprep.mubr.bf16.mxu0 0
        %1123 = vmatmul.mubr.bf16.gmra.mxu0 %v894
        %v1124 = vpop.f32.mrf.mxu0
        %v1125 = vadd.f32 %v752, %v1124
        %v1126 = vpop.f32.mrf.mxu0
        %v1127 = vpop.f32.mrf.mxu0
        %v1128 = vadd.f32 %v752, %v1127
        %v1129 = vpop.f32.mrf.mxu0
        %1130 = vmatprep.mubr.bf16.mxu0 0
        %1131 = vmatmul.mubr.bf16.gmra.mxu0 %v895
        %v1132 = vpop.f32.mrf.mxu0
        %v1133 = vadd.f32 %v752, %v1132
        %v1134 = vpop.f32.mrf.mxu0
        %v1135 = vpop.f32.mrf.mxu0
        %v1136 = vadd.f32 %v752, %v1135
        %v1137 = vpop.f32.mrf.mxu0
        %1138 = vmatprep.mubr.bf16.mxu0 0
        %1139 = vmatmul.mubr.bf16.gmra.mxu0 %v896
        %v1140 = vpop.f32.mrf.mxu0
        %v1141 = vadd.f32 %v752, %v1140
        %v1142 = vpop.f32.mrf.mxu0
        %v1143 = vpop.f32.mrf.mxu0
        %v1144 = vadd.f32 %v752, %v1143
        %v1145 = vpop.f32.mrf.mxu0
        %1146 = vmatprep.mubr.bf16.mxu0 0
        %1147 = vmatmul.mubr.bf16.gmra.mxu0 %v897
        %v1148 = vpop.f32.mrf.mxu0
        %v1149 = vadd.f32 %v752, %v1148
        %v1150 = vpop.f32.mrf.mxu0
        %v1151 = vpop.f32.mrf.mxu0
        %v1152 = vadd.f32 %v752, %v1151
        %v1153 = vpop.f32.mrf.mxu0
        %1154 = vmatprep.mubr.bf16.mxu0 0
        %1155 = vmatmul.mubr.bf16.gmra.mxu0 %v898
        %v1156 = vpop.f32.mrf.mxu0
        %v1157 = vadd.f32 %v752, %v1156
        %v1158 = vpop.f32.mrf.mxu0
        %v1159 = vpop.f32.mrf.mxu0
        %v1160 = vadd.f32 %v752, %v1159
        %v1161 = vpop.f32.mrf.mxu0
        %1162 = vmatprep.mubr.bf16.mxu0 0
        %1163 = vmatmul.mubr.bf16.gmra.mxu0 %v899
        %v1164 = vpop.f32.mrf.mxu0
        %v1165 = vadd.f32 %v752, %v1164
        %v1166 = vpop.f32.mrf.mxu0
        %v1167 = vpop.f32.mrf.mxu0
        %v1168 = vadd.f32 %v752, %v1167
        %v1169 = vpop.f32.mrf.mxu0
        %1170 = vmatprep.mubr.bf16.mxu0 0
        %1171 = vmatmul.mubr.bf16.gmra.mxu0 %v900
        %v1172 = vpop.f32.mrf.mxu0
        %v1173 = vadd.f32 %v752, %v1172
        %v1174 = vpop.f32.mrf.mxu0
        %v1175 = vpop.f32.mrf.mxu0
        %v1176 = vadd.f32 %v752, %v1175
        %v1177 = vpop.f32.mrf.mxu0
        %1178 = vmatprep.mubr.bf16.mxu0 0
        %1179 = vmatmul.mubr.bf16.gmra.mxu0 %v901
        %v1180 = vpop.f32.mrf.mxu0
        %v1181 = vadd.f32 %v752, %v1180
        %v1182 = vpop.f32.mrf.mxu0
        %v1183 = vpop.f32.mrf.mxu0
        %v1184 = vadd.f32 %v752, %v1183
        %v1185 = vpop.f32.mrf.mxu0
        %1186 = vmatprep.mubr.bf16.mxu0 0
        %1187 = vmatmul.mubr.bf16.gmra.mxu0 %v902
        %v1188 = vpop.f32.mrf.mxu0
        %v1189 = vadd.f32 %v752, %v1188
        %v1190 = vpop.f32.mrf.mxu0
        %v1191 = vpop.f32.mrf.mxu0
        %v1192 = vadd.f32 %v752, %v1191
        %v1193 = vpop.f32.mrf.mxu0
        %1194 = vmatprep.mubr.bf16.mxu0 0
        %1195 = vmatmul.mubr.bf16.gmra.mxu0 %v903
        %v1196 = vpop.f32.mrf.mxu0
        %v1197 = vadd.f32 %v752, %v1196
        %v1198 = vpop.f32.mrf.mxu0
        %v1199 = vpop.f32.mrf.mxu0
        %v1200 = vadd.f32 %v752, %v1199
        %v1201 = vpop.f32.mrf.mxu0
        %1202 = vmatprep.mubr.bf16.mxu0 0
        %1203 = vmatmul.mubr.bf16.gmra.mxu0 %v904
        %v1204 = vpop.f32.mrf.mxu0
        %v1205 = vadd.f32 %v752, %v1204
        %v1206 = vpop.f32.mrf.mxu0
        %v1207 = vpop.f32.mrf.mxu0
        %v1208 = vadd.f32 %v752, %v1207
        %v1209 = vpop.f32.mrf.mxu0
        %1210 = vmatprep.mubr.bf16.mxu0 0
        %1211 = vmatmul.mubr.bf16.gmra.mxu0 %v905
        %v1212 = vpop.f32.mrf.mxu0
        %v1213 = vadd.f32 %v752, %v1212
        %v1214 = vpop.f32.mrf.mxu0
        %v1215 = vpop.f32.mrf.mxu0
        %v1216 = vadd.f32 %v752, %v1215
        %v1217 = vpop.f32.mrf.mxu0
        %1218 = vmatprep.mubr.bf16.mxu0 0
        %1219 = vmatmul.mubr.bf16.gmra.mxu0 %v906
        %v1220 = vpop.f32.mrf.mxu0
        %v1221 = vadd.f32 %v752, %v1220
        %v1222 = vpop.f32.mrf.mxu0
        %v1223 = vpop.f32.mrf.mxu0
        %v1224 = vadd.f32 %v752, %v1223
        %v1225 = vpop.f32.mrf.mxu0
        %1226 = vmatprep.mubr.bf16.mxu0 0
        %1227 = vmatmul.mubr.bf16.gmra.mxu0 %v907
        %v1228 = vpop.f32.mrf.mxu0
        %v1229 = vadd.f32 %v752, %v1228
        %v1230 = vpop.f32.mrf.mxu0
        %v1231 = vpop.f32.mrf.mxu0
        %v1232 = vadd.f32 %v752, %v1231
        %v1233 = vpop.f32.mrf.mxu0
        %1234 = vmatprep.mubr.bf16.mxu0 0
        %1235 = vmatmul.mubr.bf16.gmra.mxu0 %v908
        %v1236 = vpop.f32.mrf.mxu0
        %v1237 = vadd.f32 %v752, %v1236
        %v1238 = vpop.f32.mrf.mxu0
        %v1239 = vpop.f32.mrf.mxu0
        %v1240 = vadd.f32 %v752, %v1239
        %v1241 = vpop.f32.mrf.mxu0
        %1242 = vmatprep.mubr.bf16.mxu0 0
        %1243 = vmatmul.mubr.bf16.gmra.mxu0 %v909
        %v1244 = vpop.f32.mrf.mxu0
        %v1245 = vadd.f32 %v752, %v1244
        %v1246 = vpop.f32.mrf.mxu0
        %v1247 = vpop.f32.mrf.mxu0
        %v1248 = vadd.f32 %v752, %v1247
        %v1249 = vpop.f32.mrf.mxu0
        %1250 = vmatprep.mubr.bf16.mxu0 0
        %1251 = vmatmul.mubr.bf16.gmra.mxu0 %v910
        %v1252 = vpop.f32.mrf.mxu0
        %v1253 = vadd.f32 %v752, %v1252
        %v1254 = vpop.f32.mrf.mxu0
        %v1255 = vpop.f32.mrf.mxu0
        %v1256 = vadd.f32 %v752, %v1255
        %v1257 = vpop.f32.mrf.mxu0
        %1258 = vmatprep.mubr.bf16.mxu0 0
        %1259 = vmatmul.mubr.bf16.gmra.mxu0 %v911
        %v1260 = vpop.f32.mrf.mxu0
        %v1261 = vadd.f32 %v752, %v1260
        %v1262 = vpop.f32.mrf.mxu0
        %v1263 = vpop.f32.mrf.mxu0
        %v1264 = vadd.f32 %v752, %v1263
        %v1265 = vpop.f32.mrf.mxu0
        %1266 = vmatprep.mubr.bf16.mxu0 0
        %1267 = vmatmul.mubr.bf16.gmra.mxu0 %v912
        %v1268 = vpop.f32.mrf.mxu0
        %v1269 = vadd.f32 %v752, %v1268
        %v1270 = vpop.f32.mrf.mxu0
        %v1271 = vpop.f32.mrf.mxu0
        %v1272 = vadd.f32 %v752, %v1271
        %v1273 = vpop.f32.mrf.mxu0
        %1274 = vmatprep.mubr.bf16.mxu0 0
        %1275 = vmatmul.mubr.bf16.gmra.mxu0 %v913
        %v1276 = vpop.f32.mrf.mxu0
        %v1277 = vadd.f32 %v752, %v1276
        %v1278 = vpop.f32.mrf.mxu0
        %v1279 = vpop.f32.mrf.mxu0
        %v1280 = vadd.f32 %v752, %v1279
        %v1281 = vpop.f32.mrf.mxu0
        %1282 = vdwg.mxu0
        %v1283 = vmax.f32 %v1029, 0.0
        %v1284 = vmax.f32 %v1032, 0.0
        %v1285 = vmax.f32 %v1037, 0.0
        %v1286 = vmax.f32 %v1040, 0.0
        %v1287 = vmax.f32 %v1045, 0.0
        %v1288 = vmax.f32 %v1048, 0.0
        %v1289 = vmax.f32 %v1053, 0.0
        %v1290 = vmax.f32 %v1056, 0.0
        %v1291 = vmax.f32 %v1061, 0.0
        %v1292 = vmax.f32 %v1064, 0.0
        %v1293 = vmax.f32 %v1069, 0.0
        %v1294 = vmax.f32 %v1072, 0.0
        %v1295 = vmax.f32 %v1077, 0.0
        %v1296 = vmax.f32 %v1080, 0.0
        %v1297 = vmax.f32 %v1085, 0.0
        %v1298 = vmax.f32 %v1088, 0.0
        %v1299 = vmax.f32 %v1093, 0.0
        %v1300 = vmax.f32 %v1096, 0.0
        %v1301 = vmax.f32 %v1101, 0.0
        %v1302 = vmax.f32 %v1104, 0.0
        %v1303 = vmax.f32 %v1109, 0.0
        %v1304 = vmax.f32 %v1112, 0.0
        %v1305 = vmax.f32 %v1117, 0.0
        %v1306 = vmax.f32 %v1120, 0.0
        %v1307 = vmax.f32 %v1125, 0.0
        %v1308 = vmax.f32 %v1128, 0.0
        %v1309 = vmax.f32 %v1133, 0.0
        %v1310 = vmax.f32 %v1136, 0.0
        %v1311 = vmax.f32 %v1141, 0.0
        %v1312 = vmax.f32 %v1144, 0.0
        %v1313 = vmax.f32 %v1149, 0.0
        %v1314 = vmax.f32 %v1152, 0.0
        %v1315 = vmax.f32 %v1157, 0.0
        %v1316 = vmax.f32 %v1160, 0.0
        %v1317 = vmax.f32 %v1165, 0.0
        %v1318 = vmax.f32 %v1168, 0.0
        %v1319 = vmax.f32 %v1173, 0.0
        %v1320 = vmax.f32 %v1176, 0.0
        %v1321 = vmax.f32 %v1181, 0.0
        %v1322 = vmax.f32 %v1184, 0.0
        %v1323 = vmax.f32 %v1189, 0.0
        %v1324 = vmax.f32 %v1192, 0.0
        %v1325 = vmax.f32 %v1197, 0.0
        %v1326 = vmax.f32 %v1200, 0.0
        %v1327 = vmax.f32 %v1205, 0.0
        %v1328 = vmax.f32 %v1208, 0.0
        %v1329 = vmax.f32 %v1213, 0.0
        %v1330 = vmax.f32 %v1216, 0.0
        %v1331 = vmax.f32 %v1221, 0.0
        %v1332 = vmax.f32 %v1224, 0.0
        %v1333 = vmax.f32 %v1229, 0.0
        %v1334 = vmax.f32 %v1232, 0.0
        %v1335 = vmax.f32 %v1237, 0.0
        %v1336 = vmax.f32 %v1240, 0.0
        %v1337 = vmax.f32 %v1245, 0.0
        %v1338 = vmax.f32 %v1248, 0.0
        %v1339 = vmax.f32 %v1253, 0.0
        %v1340 = vmax.f32 %v1256, 0.0
        %v1341 = vmax.f32 %v1261, 0.0
        %v1342 = vmax.f32 %v1264, 0.0
        %v1343 = vmax.f32 %v1269, 0.0
        %v1344 = vmax.f32 %v1272, 0.0
        %v1345 = vmax.f32 %v1277, 0.0
        %v1346 = vmax.f32 %v1280, 0.0
        %v1347 = vld [vmem:[#allocation2] sm:$0x1]
        %v1349 = vlaneseq
        %v1350 = vshrl.u32 %v1349, 7
        %v1351 = vsub.s32 0, %v1350
        %v1352 = vrot.slane %v1347, %v1351
        %v1354 = vmul.f32 %v1283, %v1352
        %v1355 = vmul.f32 %v1284, %v1352
        %v1356 = vmul.f32 %v1285, %v1352
        %v1357 = vmul.f32 %v1286, %v1352
        %v1358 = vmul.f32 %v1287, %v1352
        %v1359 = vmul.f32 %v1288, %v1352
        %v1360 = vmul.f32 %v1289, %v1352
        %v1361 = vmul.f32 %v1290, %v1352
        %v1362 = vmul.f32 %v1291, %v1352
        %v1363 = vmul.f32 %v1292, %v1352
        %v1364 = vmul.f32 %v1293, %v1352
        %v1365 = vmul.f32 %v1294, %v1352
        %v1366 = vmul.f32 %v1295, %v1352
        %v1367 = vmul.f32 %v1296, %v1352
        %v1368 = vmul.f32 %v1297, %v1352
        %v1369 = vmul.f32 %v1298, %v1352
        %v1370 = vmul.f32 %v1299, %v1352
        %v1371 = vmul.f32 %v1300, %v1352
        %v1372 = vmul.f32 %v1301, %v1352
        %v1373 = vmul.f32 %v1302, %v1352
        %v1374 = vmul.f32 %v1303, %v1352
        %v1375 = vmul.f32 %v1304, %v1352
        %v1376 = vmul.f32 %v1305, %v1352
        %v1377 = vmul.f32 %v1306, %v1352
        %v1378 = vmul.f32 %v1307, %v1352
        %v1379 = vmul.f32 %v1308, %v1352
        %v1380 = vmul.f32 %v1309, %v1352
        %v1381 = vmul.f32 %v1310, %v1352
        %v1382 = vmul.f32 %v1311, %v1352
        %v1383 = vmul.f32 %v1312, %v1352
        %v1384 = vmul.f32 %v1313, %v1352
        %v1385 = vmul.f32 %v1314, %v1352
        %v1386 = vmul.f32 %v1315, %v1352
        %v1387 = vmul.f32 %v1316, %v1352
        %v1388 = vmul.f32 %v1317, %v1352
        %v1389 = vmul.f32 %v1318, %v1352
        %v1390 = vmul.f32 %v1319, %v1352
        %v1391 = vmul.f32 %v1320, %v1352
        %v1392 = vmul.f32 %v1321, %v1352
        %v1393 = vmul.f32 %v1322, %v1352
        %v1394 = vmul.f32 %v1323, %v1352
        %v1395 = vmul.f32 %v1324, %v1352
        %v1396 = vmul.f32 %v1325, %v1352
        %v1397 = vmul.f32 %v1326, %v1352
        %v1398 = vmul.f32 %v1327, %v1352
        %v1399 = vmul.f32 %v1328, %v1352
        %v1400 = vmul.f32 %v1329, %v1352
        %v1401 = vmul.f32 %v1330, %v1352
        %v1402 = vmul.f32 %v1331, %v1352
        %v1403 = vmul.f32 %v1332, %v1352
        %v1404 = vmul.f32 %v1333, %v1352
        %v1405 = vmul.f32 %v1334, %v1352
        %v1406 = vmul.f32 %v1335, %v1352
        %v1407 = vmul.f32 %v1336, %v1352
        %v1408 = vmul.f32 %v1337, %v1352
        %v1409 = vmul.f32 %v1338, %v1352
        %v1410 = vmul.f32 %v1339, %v1352
        %v1411 = vmul.f32 %v1340, %v1352
        %v1412 = vmul.f32 %v1341, %v1352
        %v1413 = vmul.f32 %v1342, %v1352
        %v1414 = vmul.f32 %v1343, %v1352
        %v1415 = vmul.f32 %v1344, %v1352
        %v1416 = vmul.f32 %v1345, %v1352
        %v1417 = vmul.f32 %v1346, %v1352
        %v1418 = vpack.c.bf16 %v1355, %v1354
        %v1419 = vpack.c.bf16 %v1357, %v1356
        %v1420 = vpack.c.bf16 %v1359, %v1358
        %v1421 = vpack.c.bf16 %v1361, %v1360
        %v1422 = vpack.c.bf16 %v1363, %v1362
        %v1423 = vpack.c.bf16 %v1365, %v1364
        %v1424 = vpack.c.bf16 %v1367, %v1366
        %v1425 = vpack.c.bf16 %v1369, %v1368
        %v1426 = vpack.c.bf16 %v1371, %v1370
        %v1427 = vpack.c.bf16 %v1373, %v1372
        %v1428 = vpack.c.bf16 %v1375, %v1374
        %v1429 = vpack.c.bf16 %v1377, %v1376
        %v1430 = vpack.c.bf16 %v1379, %v1378
        %v1431 = vpack.c.bf16 %v1381, %v1380
        %v1432 = vpack.c.bf16 %v1383, %v1382
        %v1433 = vpack.c.bf16 %v1385, %v1384
        %v1434 = vpack.c.bf16 %v1387, %v1386
        %v1435 = vpack.c.bf16 %v1389, %v1388
        %v1436 = vpack.c.bf16 %v1391, %v1390
        %v1437 = vpack.c.bf16 %v1393, %v1392
        %v1438 = vpack.c.bf16 %v1395, %v1394
        %v1439 = vpack.c.bf16 %v1397, %v1396
        %v1440 = vpack.c.bf16 %v1399, %v1398
        %v1441 = vpack.c.bf16 %v1401, %v1400
        %v1442 = vpack.c.bf16 %v1403, %v1402
        %v1443 = vpack.c.bf16 %v1405, %v1404
        %v1444 = vpack.c.bf16 %v1407, %v1406
        %v1445 = vpack.c.bf16 %v1409, %v1408
        %v1446 = vpack.c.bf16 %v1411, %v1410
        %v1447 = vpack.c.bf16 %v1413, %v1412
        %v1448 = vpack.c.bf16 %v1415, %v1414
        %v1449 = vpack.c.bf16 %v1417, %v1416
        %v1450 = vld [vmem:[%s7] sm:$0xf]
        %v1451 = vld [vmem:[%s7 + $0x4] sm:$0xf]
        %v1452 = vld [vmem:[%s7 + $0x8] sm:$0xf]
        %v1453 = vld [vmem:[%s7 + $0xc] sm:$0xf]
        %v1454 = vld [vmem:[%s7 + $0x10] sm:$0xf]
        %v1455 = vld [vmem:[%s7 + $0x14] sm:$0xf]
        %v1456 = vld [vmem:[%s7 + $0x18] sm:$0xf]
        %v1457 = vld [vmem:[%s7 + $0x1c] sm:$0xf]
        %v1458 = vld [vmem:[%s7 + $0x20] sm:$0xf]
        %v1459 = vld [vmem:[%s7 + $0x24] sm:$0xf]
        %v1460 = vld [vmem:[%s7 + $0x28] sm:$0xf]
        %v1461 = vld [vmem:[%s7 + $0x2c] sm:$0xf]
        %v1462 = vld [vmem:[%s7 + $0x30] sm:$0xf]
        %v1463 = vld [vmem:[%s7 + $0x34] sm:$0xf]
        %v1464 = vld [vmem:[%s7 + $0x38] sm:$0xf]
        %v1465 = vld [vmem:[%s7 + $0x3c] sm:$0xf]
        %v1466 = vld [vmem:[%s8] sm:$0x1]
        %v1468 = vlaneseq
        %v1469 = vshrl.u32 %v1468, 7
        %v1470 = vsub.s32 0, %v1469
        %v1471 = vrot.slane %v1466, %v1470
        %v1489 = vunpack.c.l.b16 %v1450
        %v1490 = vunpack.c.l.b16 %v1451
        %v1491 = vunpack.c.l.b16 %v1452
        %v1492 = vunpack.c.l.b16 %v1453
        %v1493 = vunpack.c.l.b16 %v1454
        %v1494 = vunpack.c.l.b16 %v1455
        %v1495 = vunpack.c.l.b16 %v1456
        %v1496 = vunpack.c.l.b16 %v1457
        %v1497 = vunpack.c.l.b16 %v1458
        %v1498 = vunpack.c.l.b16 %v1459
        %v1499 = vunpack.c.l.b16 %v1460
        %v1500 = vunpack.c.l.b16 %v1461
        %v1501 = vunpack.c.l.b16 %v1462
        %v1502 = vunpack.c.l.b16 %v1463
        %v1503 = vunpack.c.l.b16 %v1464
        %v1504 = vunpack.c.l.b16 %v1465
        %v1505 = vpack.c.b16 %v1490, %v1489
        %v1506 = vpack.c.b16 %v1492, %v1491
        %v1507 = vpack.c.b16 %v1494, %v1493
        %v1508 = vpack.c.b16 %v1496, %v1495
        %v1509 = vpack.c.b16 %v1498, %v1497
        %v1510 = vpack.c.b16 %v1500, %v1499
        %v1511 = vpack.c.b16 %v1502, %v1501
        %v1512 = vpack.c.b16 %v1504, %v1503
        %1521 = vmatprep.subr.bf16.mxu0 0
        %1522 = vmatpush1.bf16.msra.mxu0 %v1512
        %1523 = vmatprep.subr.bf16.mxu0 0
        %1524 = vmatpush1.bf16.msra.mxu0 %v1511
        %1525 = vmatprep.subr.bf16.mxu0 0
        %1526 = vmatpush1.bf16.msra.mxu0 %v1510
        %1527 = vmatprep.subr.bf16.mxu0 0
        %1528 = vmatpush1.bf16.msra.mxu0 %v1509
        %1529 = vmatprep.subr.bf16.mxu0 0
        %1530 = vmatpush1.bf16.msra.mxu0 %v1508
        %1531 = vmatprep.subr.bf16.mxu0 0
        %1532 = vmatpush1.bf16.msra.mxu0 %v1507
        %1533 = vmatprep.subr.bf16.mxu0 0
        %1534 = vmatpush1.bf16.msra.mxu0 %v1506
        %1535 = vmatprep.subr.bf16.mxu0 0
        %1536 = vmatpush1.bf16.msra.mxu0 %v1505
        %1537 = vmatprep.subr.bf16.mxu0 0
        %1538 = vmatpush2.bf16.msra.mxu0 0
        %1539 = vmatprep.subr.bf16.mxu0 0
        %1540 = vmatpush2.bf16.msra.mxu0 0
        %1541 = vmatprep.subr.bf16.mxu0 0
        %1542 = vmatpush2.bf16.msra.mxu0 0
        %1543 = vmatprep.subr.bf16.mxu0 0
        %1544 = vmatpush2.bf16.msra.mxu0 0
        %1545 = vmatprep.subr.bf16.mxu0 0
        %1546 = vmatpush2.bf16.msra.mxu0 0
        %1547 = vmatprep.subr.bf16.mxu0 0
        %1548 = vmatpush2.bf16.msra.mxu0 0
        %1549 = vmatprep.subr.bf16.mxu0 0
        %1550 = vmatpush2.bf16.msra.mxu0 0
        %1551 = vmatprep.subr.bf16.mxu0 0
        %1552 = vmatpush2.bf16.msra.mxu0 0
        %1553 = vmatprep.mubr.bf16.mxu0 0
        %1554 = vmatmul.mubr.bf16.gmra.mxu0 %v1418
        %v1555 = vpop.f32.mrf.mxu0
        %v1556 = vadd.f32 %v1471, %v1555
        %v1557 = vpop.f32.mrf.mxu0
        %v1558 = vpop.f32.mrf.mxu0
        %v1559 = vadd.f32 %v1471, %v1558
        %v1560 = vpop.f32.mrf.mxu0
        %1561 = vmatprep.mubr.bf16.mxu0 0
        %1562 = vmatmul.mubr.bf16.gmra.mxu0 %v1419
        %v1563 = vpop.f32.mrf.mxu0
        %v1564 = vadd.f32 %v1471, %v1563
        %v1565 = vpop.f32.mrf.mxu0
        %v1566 = vpop.f32.mrf.mxu0
        %v1567 = vadd.f32 %v1471, %v1566
        %v1568 = vpop.f32.mrf.mxu0
        %1569 = vmatprep.mubr.bf16.mxu0 0
        %1570 = vmatmul.mubr.bf16.gmra.mxu0 %v1420
        %v1571 = vpop.f32.mrf.mxu0
        %v1572 = vadd.f32 %v1471, %v1571
        %v1573 = vpop.f32.mrf.mxu0
        %v1574 = vpop.f32.mrf.mxu0
        %v1575 = vadd.f32 %v1471, %v1574
        %v1576 = vpop.f32.mrf.mxu0
        %1577 = vmatprep.mubr.bf16.mxu0 0
        %1578 = vmatmul.mubr.bf16.gmra.mxu0 %v1421
        %v1579 = vpop.f32.mrf.mxu0
        %v1580 = vadd.f32 %v1471, %v1579
        %v1581 = vpop.f32.mrf.mxu0
        %v1582 = vpop.f32.mrf.mxu0
        %v1583 = vadd.f32 %v1471, %v1582
        %v1584 = vpop.f32.mrf.mxu0
        %1585 = vmatprep.mubr.bf16.mxu0 0
        %1586 = vmatmul.mubr.bf16.gmra.mxu0 %v1422
        %v1587 = vpop.f32.mrf.mxu0
        %v1588 = vadd.f32 %v1471, %v1587
        %v1589 = vpop.f32.mrf.mxu0
        %v1590 = vpop.f32.mrf.mxu0
        %v1591 = vadd.f32 %v1471, %v1590
        %v1592 = vpop.f32.mrf.mxu0
        %1593 = vmatprep.mubr.bf16.mxu0 0
        %1594 = vmatmul.mubr.bf16.gmra.mxu0 %v1423
        %v1595 = vpop.f32.mrf.mxu0
        %v1596 = vadd.f32 %v1471, %v1595
        %v1597 = vpop.f32.mrf.mxu0
        %v1598 = vpop.f32.mrf.mxu0
        %v1599 = vadd.f32 %v1471, %v1598
        %v1600 = vpop.f32.mrf.mxu0
        %1601 = vmatprep.mubr.bf16.mxu0 0
        %1602 = vmatmul.mubr.bf16.gmra.mxu0 %v1424
        %v1603 = vpop.f32.mrf.mxu0
        %v1604 = vadd.f32 %v1471, %v1603
        %v1605 = vpop.f32.mrf.mxu0
        %v1606 = vpop.f32.mrf.mxu0
        %v1607 = vadd.f32 %v1471, %v1606
        %v1608 = vpop.f32.mrf.mxu0
        %1609 = vmatprep.mubr.bf16.mxu0 0
        %1610 = vmatmul.mubr.bf16.gmra.mxu0 %v1425
        %v1611 = vpop.f32.mrf.mxu0
        %v1612 = vadd.f32 %v1471, %v1611
        %v1613 = vpop.f32.mrf.mxu0
        %v1614 = vpop.f32.mrf.mxu0
        %v1615 = vadd.f32 %v1471, %v1614
        %v1616 = vpop.f32.mrf.mxu0
        %1617 = vmatprep.mubr.bf16.mxu0 0
        %1618 = vmatmul.mubr.bf16.gmra.mxu0 %v1426
        %v1619 = vpop.f32.mrf.mxu0
        %v1620 = vadd.f32 %v1471, %v1619
        %v1621 = vpop.f32.mrf.mxu0
        %v1622 = vpop.f32.mrf.mxu0
        %v1623 = vadd.f32 %v1471, %v1622
        %v1624 = vpop.f32.mrf.mxu0
        %1625 = vmatprep.mubr.bf16.mxu0 0
        %1626 = vmatmul.mubr.bf16.gmra.mxu0 %v1427
        %v1627 = vpop.f32.mrf.mxu0
        %v1628 = vadd.f32 %v1471, %v1627
        %v1629 = vpop.f32.mrf.mxu0
        %v1630 = vpop.f32.mrf.mxu0
        %v1631 = vadd.f32 %v1471, %v1630
        %v1632 = vpop.f32.mrf.mxu0
        %1633 = vmatprep.mubr.bf16.mxu0 0
        %1634 = vmatmul.mubr.bf16.gmra.mxu0 %v1428
        %v1635 = vpop.f32.mrf.mxu0
        %v1636 = vadd.f32 %v1471, %v1635
        %v1637 = vpop.f32.mrf.mxu0
        %v1638 = vpop.f32.mrf.mxu0
        %v1639 = vadd.f32 %v1471, %v1638
        %v1640 = vpop.f32.mrf.mxu0
        %1641 = vmatprep.mubr.bf16.mxu0 0
        %1642 = vmatmul.mubr.bf16.gmra.mxu0 %v1429
        %v1643 = vpop.f32.mrf.mxu0
        %v1644 = vadd.f32 %v1471, %v1643
        %v1645 = vpop.f32.mrf.mxu0
        %v1646 = vpop.f32.mrf.mxu0
        %v1647 = vadd.f32 %v1471, %v1646
        %v1648 = vpop.f32.mrf.mxu0
        %1649 = vmatprep.mubr.bf16.mxu0 0
        %1650 = vmatmul.mubr.bf16.gmra.mxu0 %v1430
        %v1651 = vpop.f32.mrf.mxu0
        %v1652 = vadd.f32 %v1471, %v1651
        %v1653 = vpop.f32.mrf.mxu0
        %v1654 = vpop.f32.mrf.mxu0
        %v1655 = vadd.f32 %v1471, %v1654
        %v1656 = vpop.f32.mrf.mxu0
        %1657 = vmatprep.mubr.bf16.mxu0 0
        %1658 = vmatmul.mubr.bf16.gmra.mxu0 %v1431
        %v1659 = vpop.f32.mrf.mxu0
        %v1660 = vadd.f32 %v1471, %v1659
        %v1661 = vpop.f32.mrf.mxu0
        %v1662 = vpop.f32.mrf.mxu0
        %v1663 = vadd.f32 %v1471, %v1662
        %v1664 = vpop.f32.mrf.mxu0
        %1665 = vmatprep.mubr.bf16.mxu0 0
        %1666 = vmatmul.mubr.bf16.gmra.mxu0 %v1432
        %v1667 = vpop.f32.mrf.mxu0
        %v1668 = vadd.f32 %v1471, %v1667
        %v1669 = vpop.f32.mrf.mxu0
        %v1670 = vpop.f32.mrf.mxu0
        %v1671 = vadd.f32 %v1471, %v1670
        %v1672 = vpop.f32.mrf.mxu0
        %1673 = vmatprep.mubr.bf16.mxu0 0
        %1674 = vmatmul.mubr.bf16.gmra.mxu0 %v1433
        %v1675 = vpop.f32.mrf.mxu0
        %v1676 = vadd.f32 %v1471, %v1675
        %v1677 = vpop.f32.mrf.mxu0
        %v1678 = vpop.f32.mrf.mxu0
        %v1679 = vadd.f32 %v1471, %v1678
        %v1680 = vpop.f32.mrf.mxu0
        %1681 = vmatprep.mubr.bf16.mxu0 0
        %1682 = vmatmul.mubr.bf16.gmra.mxu0 %v1434
        %v1683 = vpop.f32.mrf.mxu0
        %v1684 = vadd.f32 %v1471, %v1683
        %v1685 = vpop.f32.mrf.mxu0
        %v1686 = vpop.f32.mrf.mxu0
        %v1687 = vadd.f32 %v1471, %v1686
        %v1688 = vpop.f32.mrf.mxu0
        %1689 = vmatprep.mubr.bf16.mxu0 0
        %1690 = vmatmul.mubr.bf16.gmra.mxu0 %v1435
        %v1691 = vpop.f32.mrf.mxu0
        %v1692 = vadd.f32 %v1471, %v1691
        %v1693 = vpop.f32.mrf.mxu0
        %v1694 = vpop.f32.mrf.mxu0
        %v1695 = vadd.f32 %v1471, %v1694
        %v1696 = vpop.f32.mrf.mxu0
        %1697 = vmatprep.mubr.bf16.mxu0 0
        %1698 = vmatmul.mubr.bf16.gmra.mxu0 %v1436
        %v1699 = vpop.f32.mrf.mxu0
        %v1700 = vadd.f32 %v1471, %v1699
        %v1701 = vpop.f32.mrf.mxu0
        %v1702 = vpop.f32.mrf.mxu0
        %v1703 = vadd.f32 %v1471, %v1702
        %v1704 = vpop.f32.mrf.mxu0
        %1705 = vmatprep.mubr.bf16.mxu0 0
        %1706 = vmatmul.mubr.bf16.gmra.mxu0 %v1437
        %v1707 = vpop.f32.mrf.mxu0
        %v1708 = vadd.f32 %v1471, %v1707
        %v1709 = vpop.f32.mrf.mxu0
        %v1710 = vpop.f32.mrf.mxu0
        %v1711 = vadd.f32 %v1471, %v1710
        %v1712 = vpop.f32.mrf.mxu0
        %1713 = vmatprep.mubr.bf16.mxu0 0
        %1714 = vmatmul.mubr.bf16.gmra.mxu0 %v1438
        %v1715 = vpop.f32.mrf.mxu0
        %v1716 = vadd.f32 %v1471, %v1715
        %v1717 = vpop.f32.mrf.mxu0
        %v1718 = vpop.f32.mrf.mxu0
        %v1719 = vadd.f32 %v1471, %v1718
        %v1720 = vpop.f32.mrf.mxu0
        %1721 = vmatprep.mubr.bf16.mxu0 0
        %1722 = vmatmul.mubr.bf16.gmra.mxu0 %v1439
        %v1723 = vpop.f32.mrf.mxu0
        %v1724 = vadd.f32 %v1471, %v1723
        %v1725 = vpop.f32.mrf.mxu0
        %v1726 = vpop.f32.mrf.mxu0
        %v1727 = vadd.f32 %v1471, %v1726
        %v1728 = vpop.f32.mrf.mxu0
        %1729 = vmatprep.mubr.bf16.mxu0 0
        %1730 = vmatmul.mubr.bf16.gmra.mxu0 %v1440
        %v1731 = vpop.f32.mrf.mxu0
        %v1732 = vadd.f32 %v1471, %v1731
        %v1733 = vpop.f32.mrf.mxu0
        %v1734 = vpop.f32.mrf.mxu0
        %v1735 = vadd.f32 %v1471, %v1734
        %v1736 = vpop.f32.mrf.mxu0
        %1737 = vmatprep.mubr.bf16.mxu0 0
        %1738 = vmatmul.mubr.bf16.gmra.mxu0 %v1441
        %v1739 = vpop.f32.mrf.mxu0
        %v1740 = vadd.f32 %v1471, %v1739
        %v1741 = vpop.f32.mrf.mxu0
        %v1742 = vpop.f32.mrf.mxu0
        %v1743 = vadd.f32 %v1471, %v1742
        %v1744 = vpop.f32.mrf.mxu0
        %1745 = vmatprep.mubr.bf16.mxu0 0
        %1746 = vmatmul.mubr.bf16.gmra.mxu0 %v1442
        %v1747 = vpop.f32.mrf.mxu0
        %v1748 = vadd.f32 %v1471, %v1747
        %v1749 = vpop.f32.mrf.mxu0
        %v1750 = vpop.f32.mrf.mxu0
        %v1751 = vadd.f32 %v1471, %v1750
        %v1752 = vpop.f32.mrf.mxu0
        %1753 = vmatprep.mubr.bf16.mxu0 0
        %1754 = vmatmul.mubr.bf16.gmra.mxu0 %v1443
        %v1755 = vpop.f32.mrf.mxu0
        %v1756 = vadd.f32 %v1471, %v1755
        %v1757 = vpop.f32.mrf.mxu0
        %v1758 = vpop.f32.mrf.mxu0
        %v1759 = vadd.f32 %v1471, %v1758
        %v1760 = vpop.f32.mrf.mxu0
        %1761 = vmatprep.mubr.bf16.mxu0 0
        %1762 = vmatmul.mubr.bf16.gmra.mxu0 %v1444
        %v1763 = vpop.f32.mrf.mxu0
        %v1764 = vadd.f32 %v1471, %v1763
        %v1765 = vpop.f32.mrf.mxu0
        %v1766 = vpop.f32.mrf.mxu0
        %v1767 = vadd.f32 %v1471, %v1766
        %v1768 = vpop.f32.mrf.mxu0
        %1769 = vmatprep.mubr.bf16.mxu0 0
        %1770 = vmatmul.mubr.bf16.gmra.mxu0 %v1445
        %v1771 = vpop.f32.mrf.mxu0
        %v1772 = vadd.f32 %v1471, %v1771
        %v1773 = vpop.f32.mrf.mxu0
        %v1774 = vpop.f32.mrf.mxu0
        %v1775 = vadd.f32 %v1471, %v1774
        %v1776 = vpop.f32.mrf.mxu0
        %1777 = vmatprep.mubr.bf16.mxu0 0
        %1778 = vmatmul.mubr.bf16.gmra.mxu0 %v1446
        %v1779 = vpop.f32.mrf.mxu0
        %v1780 = vadd.f32 %v1471, %v1779
        %v1781 = vpop.f32.mrf.mxu0
        %v1782 = vpop.f32.mrf.mxu0
        %v1783 = vadd.f32 %v1471, %v1782
        %v1784 = vpop.f32.mrf.mxu0
        %1785 = vmatprep.mubr.bf16.mxu0 0
        %1786 = vmatmul.mubr.bf16.gmra.mxu0 %v1447
        %v1787 = vpop.f32.mrf.mxu0
        %v1788 = vadd.f32 %v1471, %v1787
        %v1789 = vpop.f32.mrf.mxu0
        %v1790 = vpop.f32.mrf.mxu0
        %v1791 = vadd.f32 %v1471, %v1790
        %v1792 = vpop.f32.mrf.mxu0
        %1793 = vmatprep.mubr.bf16.mxu0 0
        %1794 = vmatmul.mubr.bf16.gmra.mxu0 %v1448
        %v1795 = vpop.f32.mrf.mxu0
        %v1796 = vadd.f32 %v1471, %v1795
        %v1797 = vpop.f32.mrf.mxu0
        %v1798 = vpop.f32.mrf.mxu0
        %v1799 = vadd.f32 %v1471, %v1798
        %v1800 = vpop.f32.mrf.mxu0
        %1801 = vmatprep.mubr.bf16.mxu0 0
        %1802 = vmatmul.mubr.bf16.gmra.mxu0 %v1449
        %v1803 = vpop.f32.mrf.mxu0
        %v1804 = vadd.f32 %v1471, %v1803
        %v1805 = vpop.f32.mrf.mxu0
        %v1806 = vpop.f32.mrf.mxu0
        %v1807 = vadd.f32 %v1471, %v1806
        %v1808 = vpop.f32.mrf.mxu0
        %1809 = vdwg.mxu0
        %v1810 = vpack.c.bf16 %v1559, %v1556
        %v1811 = vpack.c.bf16 %v1567, %v1564
        %v1812 = vpack.c.bf16 %v1575, %v1572
        %v1813 = vpack.c.bf16 %v1583, %v1580
        %v1814 = vpack.c.bf16 %v1591, %v1588
        %v1815 = vpack.c.bf16 %v1599, %v1596
        %v1816 = vpack.c.bf16 %v1607, %v1604
        %v1817 = vpack.c.bf16 %v1615, %v1612
        %v1818 = vpack.c.bf16 %v1623, %v1620
        %v1819 = vpack.c.bf16 %v1631, %v1628
        %v1820 = vpack.c.bf16 %v1639, %v1636
        %v1821 = vpack.c.bf16 %v1647, %v1644
        %v1822 = vpack.c.bf16 %v1655, %v1652
        %v1823 = vpack.c.bf16 %v1663, %v1660
        %v1824 = vpack.c.bf16 %v1671, %v1668
        %v1825 = vpack.c.bf16 %v1679, %v1676
        %v1826 = vpack.c.bf16 %v1687, %v1684
        %v1827 = vpack.c.bf16 %v1695, %v1692
        %v1828 = vpack.c.bf16 %v1703, %v1700
        %v1829 = vpack.c.bf16 %v1711, %v1708
        %v1830 = vpack.c.bf16 %v1719, %v1716
        %v1831 = vpack.c.bf16 %v1727, %v1724
        %v1832 = vpack.c.bf16 %v1735, %v1732
        %v1833 = vpack.c.bf16 %v1743, %v1740
        %v1834 = vpack.c.bf16 %v1751, %v1748
        %v1835 = vpack.c.bf16 %v1759, %v1756
        %v1836 = vpack.c.bf16 %v1767, %v1764
        %v1837 = vpack.c.bf16 %v1775, %v1772
        %v1838 = vpack.c.bf16 %v1783, %v1780
        %v1839 = vpack.c.bf16 %v1791, %v1788
        %v1840 = vpack.c.bf16 %v1799, %v1796
        %v1841 = vpack.c.bf16 %v1807, %v1804
        %v1874 = vunpack.c.l.b16 %v1810
        %v1875 = vunpack.c.h.b16 %v1810
        %v1876 = vunpack.c.l.b16 %v1811
        %v1877 = vunpack.c.h.b16 %v1811
        %v1878 = vunpack.c.l.b16 %v1812
        %v1879 = vunpack.c.h.b16 %v1812
        %v1880 = vunpack.c.l.b16 %v1813
        %v1881 = vunpack.c.h.b16 %v1813
        %v1882 = vunpack.c.l.b16 %v1814
        %v1883 = vunpack.c.h.b16 %v1814
        %v1884 = vunpack.c.l.b16 %v1815
        %v1885 = vunpack.c.h.b16 %v1815
        %v1886 = vunpack.c.l.b16 %v1816
        %v1887 = vunpack.c.h.b16 %v1816
        %v1888 = vunpack.c.l.b16 %v1817
        %v1889 = vunpack.c.h.b16 %v1817
        %v1890 = vunpack.c.l.b16 %v1818
        %v1891 = vunpack.c.h.b16 %v1818
        %v1892 = vunpack.c.l.b16 %v1819
        %v1893 = vunpack.c.h.b16 %v1819
        %v1894 = vunpack.c.l.b16 %v1820
        %v1895 = vunpack.c.h.b16 %v1820
        %v1896 = vunpack.c.l.b16 %v1821
        %v1897 = vunpack.c.h.b16 %v1821
        %v1898 = vunpack.c.l.b16 %v1822
        %v1899 = vunpack.c.h.b16 %v1822
        %v1900 = vunpack.c.l.b16 %v1823
        %v1901 = vunpack.c.h.b16 %v1823
        %v1902 = vunpack.c.l.b16 %v1824
        %v1903 = vunpack.c.h.b16 %v1824
        %v1904 = vunpack.c.l.b16 %v1825
        %v1905 = vunpack.c.h.b16 %v1825
        %v1906 = vunpack.c.l.b16 %v1826
        %v1907 = vunpack.c.h.b16 %v1826
        %v1908 = vunpack.c.l.b16 %v1827
        %v1909 = vunpack.c.h.b16 %v1827
        %v1910 = vunpack.c.l.b16 %v1828
        %v1911 = vunpack.c.h.b16 %v1828
        %v1912 = vunpack.c.l.b16 %v1829
        %v1913 = vunpack.c.h.b16 %v1829
        %v1914 = vunpack.c.l.b16 %v1830
        %v1915 = vunpack.c.h.b16 %v1830
        %v1916 = vunpack.c.l.b16 %v1831
        %v1917 = vunpack.c.h.b16 %v1831
        %v1918 = vunpack.c.l.b16 %v1832
        %v1919 = vunpack.c.h.b16 %v1832
        %v1920 = vunpack.c.l.b16 %v1833
        %v1921 = vunpack.c.h.b16 %v1833
        %v1922 = vunpack.c.l.b16 %v1834
        %v1923 = vunpack.c.h.b16 %v1834
        %v1924 = vunpack.c.l.b16 %v1835
        %v1925 = vunpack.c.h.b16 %v1835
        %v1926 = vunpack.c.l.b16 %v1836
        %v1927 = vunpack.c.h.b16 %v1836
        %v1928 = vunpack.c.l.b16 %v1837
        %v1929 = vunpack.c.h.b16 %v1837
        %v1930 = vunpack.c.l.b16 %v1838
        %v1931 = vunpack.c.h.b16 %v1838
        %v1932 = vunpack.c.l.b16 %v1839
        %v1933 = vunpack.c.h.b16 %v1839
        %v1934 = vunpack.c.l.b16 %v1840
        %v1935 = vunpack.c.h.b16 %v1840
        %v1936 = vunpack.c.l.b16 %v1841
        %v1937 = vunpack.c.h.b16 %v1841
        %v1938 = vpack.c.b16 %v1874, %v1874
        %v1939 = vpack.c.b16 %v1875, %v1875
        %v1940 = vpack.c.b16 %v1876, %v1876
        %v1941 = vpack.c.b16 %v1877, %v1877
        %v1942 = vpack.c.b16 %v1878, %v1878
        %v1943 = vpack.c.b16 %v1879, %v1879
        %v1944 = vpack.c.b16 %v1880, %v1880
        %v1945 = vpack.c.b16 %v1881, %v1881
        %v1946 = vpack.c.b16 %v1882, %v1882
        %v1947 = vpack.c.b16 %v1883, %v1883
        %v1948 = vpack.c.b16 %v1884, %v1884
        %v1949 = vpack.c.b16 %v1885, %v1885
        %v1950 = vpack.c.b16 %v1886, %v1886
        %v1951 = vpack.c.b16 %v1887, %v1887
        %v1952 = vpack.c.b16 %v1888, %v1888
        %v1953 = vpack.c.b16 %v1889, %v1889
        %v1954 = vpack.c.b16 %v1890, %v1890
        %v1955 = vpack.c.b16 %v1891, %v1891
        %v1956 = vpack.c.b16 %v1892, %v1892
        %v1957 = vpack.c.b16 %v1893, %v1893
        %v1958 = vpack.c.b16 %v1894, %v1894
        %v1959 = vpack.c.b16 %v1895, %v1895
        %v1960 = vpack.c.b16 %v1896, %v1896
        %v1961 = vpack.c.b16 %v1897, %v1897
        %v1962 = vpack.c.b16 %v1898, %v1898
        %v1963 = vpack.c.b16 %v1899, %v1899
        %v1964 = vpack.c.b16 %v1900, %v1900
        %v1965 = vpack.c.b16 %v1901, %v1901
        %v1966 = vpack.c.b16 %v1902, %v1902
        %v1967 = vpack.c.b16 %v1903, %v1903
        %v1968 = vpack.c.b16 %v1904, %v1904
        %v1969 = vpack.c.b16 %v1905, %v1905
        %v1970 = vpack.c.b16 %v1906, %v1906
        %v1971 = vpack.c.b16 %v1907, %v1907
        %v1972 = vpack.c.b16 %v1908, %v1908
        %v1973 = vpack.c.b16 %v1909, %v1909
        %v1974 = vpack.c.b16 %v1910, %v1910
        %v1975 = vpack.c.b16 %v1911, %v1911
        %v1976 = vpack.c.b16 %v1912, %v1912
        %v1977 = vpack.c.b16 %v1913, %v1913
        %v1978 = vpack.c.b16 %v1914, %v1914
        %v1979 = vpack.c.b16 %v1915, %v1915
        %v1980 = vpack.c.b16 %v1916, %v1916
        %v1981 = vpack.c.b16 %v1917, %v1917
        %v1982 = vpack.c.b16 %v1918, %v1918
        %v1983 = vpack.c.b16 %v1919, %v1919
        %v1984 = vpack.c.b16 %v1920, %v1920
        %v1985 = vpack.c.b16 %v1921, %v1921
        %v1986 = vpack.c.b16 %v1922, %v1922
        %v1987 = vpack.c.b16 %v1923, %v1923
        %v1988 = vpack.c.b16 %v1924, %v1924
        %v1989 = vpack.c.b16 %v1925, %v1925
        %v1990 = vpack.c.b16 %v1926, %v1926
        %v1991 = vpack.c.b16 %v1927, %v1927
        %v1992 = vpack.c.b16 %v1928, %v1928
        %v1993 = vpack.c.b16 %v1929, %v1929
        %v1994 = vpack.c.b16 %v1930, %v1930
        %v1995 = vpack.c.b16 %v1931, %v1931
        %v1996 = vpack.c.b16 %v1932, %v1932
        %v1997 = vpack.c.b16 %v1933, %v1933
        %v1998 = vpack.c.b16 %v1934, %v1934
        %v1999 = vpack.c.b16 %v1935, %v1935
        %v2000 = vpack.c.b16 %v1936, %v1936
        %v2001 = vpack.c.b16 %v1937, %v1937
        %2066 = vst [vmem:[%s396] sm:$0xf] %v1938
        %2067 = vst [vmem:[%s396 + $0x4] sm:$0xf] %v1939
        %2068 = vst [vmem:[%s396 + $0x8] sm:$0xf] %v1940
        %2069 = vst [vmem:[%s396 + $0xc] sm:$0xf] %v1941
        %2070 = vst [vmem:[%s396 + $0x10] sm:$0xf] %v1942
        %2071 = vst [vmem:[%s396 + $0x14] sm:$0xf] %v1943
        %2072 = vst [vmem:[%s396 + $0x18] sm:$0xf] %v1944
        %2073 = vst [vmem:[%s396 + $0x1c] sm:$0xf] %v1945
        %2074 = vst [vmem:[%s396 + $0x20] sm:$0xf] %v1946
        %2075 = vst [vmem:[%s396 + $0x24] sm:$0xf] %v1947
        %2076 = vst [vmem:[%s396 + $0x28] sm:$0xf] %v1948
        %2077 = vst [vmem:[%s396 + $0x2c] sm:$0xf] %v1949
        %2078 = vst [vmem:[%s396 + $0x30] sm:$0xf] %v1950
        %2079 = vst [vmem:[%s396 + $0x34] sm:$0xf] %v1951
        %2080 = vst [vmem:[%s396 + $0x38] sm:$0xf] %v1952
        %2081 = vst [vmem:[%s396 + $0x3c] sm:$0xf] %v1953
        %2082 = vst [vmem:[%s396 + $0x40] sm:$0xf] %v1954
        %2083 = vst [vmem:[%s396 + $0x44] sm:$0xf] %v1955
        %2084 = vst [vmem:[%s396 + $0x48] sm:$0xf] %v1956
        %2085 = vst [vmem:[%s396 + $0x4c] sm:$0xf] %v1957
        %2086 = vst [vmem:[%s396 + $0x50] sm:$0xf] %v1958
        %2087 = vst [vmem:[%s396 + $0x54] sm:$0xf] %v1959
        %2088 = vst [vmem:[%s396 + $0x58] sm:$0xf] %v1960
        %2089 = vst [vmem:[%s396 + $0x5c] sm:$0xf] %v1961
        %2090 = vst [vmem:[%s396 + $0x60] sm:$0xf] %v1962
        %2091 = vst [vmem:[%s396 + $0x64] sm:$0xf] %v1963
        %2092 = vst [vmem:[%s396 + $0x68] sm:$0xf] %v1964
        %2093 = vst [vmem:[%s396 + $0x6c] sm:$0xf] %v1965
        %2094 = vst [vmem:[%s396 + $0x70] sm:$0xf] %v1966
        %2095 = vst [vmem:[%s396 + $0x74] sm:$0xf] %v1967
        %2096 = vst [vmem:[%s396 + $0x78] sm:$0xf] %v1968
        %2097 = vst [vmem:[%s396 + $0x7c] sm:$0xf] %v1969
        %2098 = vst [vmem:[%s396 + $0x80] sm:$0xf] %v1970
        %2099 = vst [vmem:[%s396 + $0x84] sm:$0xf] %v1971
        %2100 = vst [vmem:[%s396 + $0x88] sm:$0xf] %v1972
        %2101 = vst [vmem:[%s396 + $0x8c] sm:$0xf] %v1973
        %2102 = vst [vmem:[%s396 + $0x90] sm:$0xf] %v1974
        %2103 = vst [vmem:[%s396 + $0x94] sm:$0xf] %v1975
        %2104 = vst [vmem:[%s396 + $0x98] sm:$0xf] %v1976
        %2105 = vst [vmem:[%s396 + $0x9c] sm:$0xf] %v1977
        %2106 = vst [vmem:[%s396 + $0xa0] sm:$0xf] %v1978
        %2107 = vst [vmem:[%s396 + $0xa4] sm:$0xf] %v1979
        %2108 = vst [vmem:[%s396 + $0xa8] sm:$0xf] %v1980
        %2109 = vst [vmem:[%s396 + $0xac] sm:$0xf] %v1981
        %2110 = vst [vmem:[%s396 + $0xb0] sm:$0xf] %v1982
        %2111 = vst [vmem:[%s396 + $0xb4] sm:$0xf] %v1983
        %2112 = vst [vmem:[%s396 + $0xb8] sm:$0xf] %v1984
        %2113 = vst [vmem:[%s396 + $0xbc] sm:$0xf] %v1985
        %2114 = vst [vmem:[%s396 + $0xc0] sm:$0xf] %v1986
        %2115 = vst [vmem:[%s396 + $0xc4] sm:$0xf] %v1987
        %2116 = vst [vmem:[%s396 + $0xc8] sm:$0xf] %v1988
        %2117 = vst [vmem:[%s396 + $0xcc] sm:$0xf] %v1989
        %2118 = vst [vmem:[%s396 + $0xd0] sm:$0xf] %v1990
        %2119 = vst [vmem:[%s396 + $0xd4] sm:$0xf] %v1991
        %2120 = vst [vmem:[%s396 + $0xd8] sm:$0xf] %v1992
        %2121 = vst [vmem:[%s396 + $0xdc] sm:$0xf] %v1993
        %2122 = vst [vmem:[%s396 + $0xe0] sm:$0xf] %v1994
        %2123 = vst [vmem:[%s396 + $0xe4] sm:$0xf] %v1995
        %2124 = vst [vmem:[%s396 + $0xe8] sm:$0xf] %v1996
        %2125 = vst [vmem:[%s396 + $0xec] sm:$0xf] %v1997
        %2126 = vst [vmem:[%s396 + $0xf0] sm:$0xf] %v1998
        %2127 = vst [vmem:[%s396 + $0xf4] sm:$0xf] %v1999
        %2128 = vst [vmem:[%s396 + $0xf8] sm:$0xf] %v2000
        %2129 = vst [vmem:[%s396 + $0xfc] sm:$0xf] %v2001
        %s2130 = sand.u32 %s251, 1
        %s2131 = scalar_lea.sflag [#allocation4], %s2130
        %s2132 = sand.u32 %s251, 1
        %s2133 = smul.addr %s2132, 256
        %s2134 = scalar_lea.vmem [#allocation3], %s2133
        %s2135 = sand.u32 %s277, 1
        %s2136 = scalar_lea.sflag [#allocation6], %s2135
        %s2137 = sand.u32 %s277, 1
        %s2138 = scalar_lea.vmem [#allocation5], %s2137
        // Predicated region
        $region61: #{onnx_model_forward.1} parent=55 // pred_check
          %p2139 = pneg %p261
        $region62: #{onnx_model_forward.1} parent=55 // pred_check_branch
          %2141 = sbr.rel (%p2139) target = $region64
        $region63: #{onnx_model_forward.1} parent=55 // pred_region
          %s2142 = smul.u32 64, %s33
          %s2144 = ssub.s32 4096, 4096
          %2145 = vsyncadd %s2131, %s2144
          %s2146 = smul.addr %s32, 64
          %s2147 = sadd.s32 %s2142, %s2146
          %s2148 = smul.addr %s2147, 64
          %s2149 = scalar_lea.hbm %s9, %s2148
          %s2150 = sshll.u32 %s2134, 4
          %s2151 = int_to_ptr.vmem [resolvable:$true] %s2150
          %2156 = dma.vmem_to_hbm [thread:$0]  %s2151, 4096, %s2149, %s2131, 64, 64, 4
        $region64: #{onnx_model_forward.1} parent=55 // pred_fallthru
          _
        // Predicated region
        $region65: #{onnx_model_forward.1} parent=55 // pred_check
          %p2157 = pneg %p287
        $region66: #{onnx_model_forward.1} parent=55 // pred_check_branch
          %2159 = sbr.rel (%p2157) target = $region68
        $region67: #{onnx_model_forward.1} parent=55 // pred_region
          %s2161 = ssub.s32 16, 16
          %2162 = vsyncadd %s2136, %s2161
          %s2163 = smul.addr %s32, 16
          %s2164 = scalar_lea.hbm %s10, %s2163
          %s2166 = sshll.u32 %s2138, 4
          %s2167 = int_to_ptr.vmem [resolvable:$true] %s2166
          %2169 = dma.vmem_to_hbm [thread:$0]  %s2167, 16, %s2164, %s2136
        $region68: #{onnx_model_forward.1} parent=55 // pred_fallthru
          _
      $region56: #{onnx_model_forward.1} parent=5 // pred_fallthru
        _
      %p2170 = scmp.le.s32.totalorder 2, %s23
      // Predicated region
      $region69: #{onnx_model_forward.1} parent=5 // pred_check
        %p2171 = pneg %p2170
      $region70: #{onnx_model_forward.1} parent=5 // pred_check_branch
        %2173 = sbr.rel (%p2171) target = $region72
      $region71: #{onnx_model_forward.1} parent=5 // pred_region
        %s2174 = ssub.s32 %s23, 2
        // Predicated region
        $region73: #{onnx_model_forward.1} parent=71 // pred_check
          %p2175 = pneg %p267
        $region74: #{onnx_model_forward.1} parent=71 // pred_check_branch
          %2177 = sbr.rel (%p2175) target = $region76
        $region75: #{onnx_model_forward.1} parent=71 // pred_region
          %s2178 = sand.u32 %s252, 1
          %s2179 = scalar_lea.sflag [#allocation4], %s2178
          %s2180 = sand.u32 %s252, 1
          %s2181 = smul.addr %s2180, 256
          %s2182 = scalar_lea.vmem [#allocation3], %s2181
          %2183 = dma.done %s2179, 4096
        $region76: #{onnx_model_forward.1} parent=71 // pred_fallthru
          _
        // Predicated region
        $region77: #{onnx_model_forward.1} parent=71 // pred_check
          %p2184 = pneg %p293
        $region78: #{onnx_model_forward.1} parent=71 // pred_check_branch
          %2186 = sbr.rel (%p2184) target = $region80
        $region79: #{onnx_model_forward.1} parent=71 // pred_region
          %s2187 = sand.u32 %s278, 1
          %s2188 = scalar_lea.sflag [#allocation6], %s2187
          %s2189 = sand.u32 %s278, 1
          %s2190 = scalar_lea.vmem [#allocation5], %s2189
          %2191 = dma.done %s2188, 16
        $region80: #{onnx_model_forward.1} parent=71 // pred_fallthru
          _
      $region72: #{onnx_model_forward.1} parent=5 // pred_fallthru
        _
    $region6: #{onnx_model_forward.1} parent=1 // loop_footer
      %s27 = sadd.s32 1, %s23
    $region7: #{onnx_model_forward.1} parent=1 // loop_footer_branch
      %22 = sbr.rel target = $region3
    $region8: #{onnx_model_forward.1} parent=1 // loop_exit
      _
    %2192 = vsyncpa [#allocation4], 1
    %s2193 = scalar_lea.sflag [#allocation4], 1
    %2194 = vsyncpa %s2193, 1
    %2195 = vsyncpa [#allocation6], 1
    %s2196 = scalar_lea.sflag [#allocation6], 1
    %2197 = vsyncpa %s2196, 1

</llo_original>
